<compile_context>
chip_gen: v6e
topology: v6e:2x2x1
jax: 0.10.0
libtpu: 0.0.40
codegen_flags: <defaults>
</compile_context>

<pallas_src>
import math

import jax
import jax.numpy as jnp
import numpy as np
from jax.experimental import pallas as pl
from jax.experimental.pallas import tpu as pltpu

# Model hyperparameters (small, consistent with a TransformerEncoderLayer).
S = 8             # sequence length
N = 2             # batch size
E = 32            # d_model
H = 4             # num heads
DH = E // H       # head dim
F = 64            # feedforward dim
NUM_LAYERS = 2
NS = N * S        # flattened token count
NH = N * H        # (head, batch) pairs folded into one matmul batch axis
EPS = 1e-5
SCALE = 1.0 / math.sqrt(DH)

# Advisory cost estimate for the XLA scheduler around the custom call.
_FLOPS = NUM_LAYERS * (2 * NS * E * 3 * E            # QKV
                       + 2 * NH * S * S * DH * 2     # scores + context
                       + 2 * NS * E * E              # output projection
                       + 2 * NS * E * F + 2 * NS * F * E)   # FFN
_TRANS = NUM_LAYERS * (NH * S * S + 2 * NS) + NS     # exp + rsqrt
_BYTES = (2 * NS * E * 4 + NH * S * 4 + 2 * E * 4
          + NUM_LAYERS * (E * 3 * E * 2 + 3 * E * 4 + E * E * 2
                          + E * F * 2 + F * 4 + F * E * 2 + 6 * E * 4))


def _layernorm(x, w, b):
    mu = jnp.mean(x, axis=-1, keepdims=True)
    var = jnp.mean((x - mu) * (x - mu), axis=-1, keepdims=True)
    return (x - mu) * jax.lax.rsqrt(var + EPS) * w + b


# --------------------------- fused Pallas kernel -----------------------------
def _encoder_kernel(x_ref, bias_ref, wqkv_ref, bqkv_ref, wo_ref, w1_ref, b1_ref,
                    w2_ref, vec_ref, fnorm_ref, out_ref, x_scr):
    l = pl.program_id(0)

    # Residual stream carried across grid steps in a VMEM scratch (f32).
    @pl.when(l == 0)
    def _():
        x_scr[...] = x_ref[...]

    x = x_scr[...]                                      # (NS, E) f32

    vec = vec_ref[0]                                    # (6, E) f32
    bo, ln1w, ln1b = vec[0:1], vec[1:2], vec[2:3]
    b2, ln2w, ln2b = vec[3:4], vec[4:5], vec[5:6]

    # ---- fused QKV projection: one (NS,E)x(E,3E) bf16 MXU matmul ----
    qkv = jnp.dot(x.astype(jnp.bfloat16), wqkv_ref[0],
                  preferred_element_type=jnp.float32) + bqkv_ref[0]   # (NS, 3E) f32

    # ---- head/batch relayout: (NS, E) -> (N*H, S, DH), cheap slices + stacks ----
    def split_heads(z):                                 # z: (NS, E)
        parts = [z[:, h * DH:(h + 1) * DH].reshape(N, S, DH) for h in range(H)]
        return jnp.stack(parts, axis=0).reshape(NH, S, DH)

    q = split_heads(qkv[:, 0:E])
    k = split_heads(qkv[:, E:2 * E])
    v = split_heads(qkv[:, 2 * E:3 * E])

    # ---- attention: all (head, batch) pairs in one batched matmul group ----
    s = jnp.einsum('bqd,bkd->bqk', q.astype(jnp.bfloat16), k.astype(jnp.bfloat16),
                   preferred_element_type=jnp.float32) * SCALE        # (NH, S, S)
    s = s + bias_ref[...]                               # (NH, 1, S) key-padding bias
    s = s - jnp.max(s, axis=-1, keepdims=True)
    p = jnp.exp(s)
    p = p * pl.reciprocal(jnp.sum(p, axis=-1, keepdims=True))         # exact reciprocal
    ctx = jnp.einsum('bqk,bkd->bqd', p.astype(jnp.bfloat16), v.astype(jnp.bfloat16),
                     preferred_element_type=jnp.float32)              # (NH, S, DH)

    # ---- merge heads back to (NS, E) and apply ONE (E,E) output projection ----
    ctx4 = ctx.reshape(H, N, S, DH)
    ctx_cat = jnp.concatenate([ctx4[h].reshape(NS, DH) for h in range(H)], axis=1)
    attn = jnp.dot(ctx_cat.astype(jnp.bfloat16), wo_ref[0],
                   preferred_element_type=jnp.float32) + bo           # (NS, E)

    # ---- residual + LN1, FFN, residual + LN2 (f32 elementwise path) ----
    y = _layernorm(x + attn, ln1w, ln1b)
    ff = jnp.dot(y.astype(jnp.bfloat16), w1_ref[0],
                 preferred_element_type=jnp.float32) + b1_ref[0]
    ff = jnp.maximum(ff, 0.0)
    ff = jnp.dot(ff.astype(jnp.bfloat16), w2_ref[0],
                 preferred_element_type=jnp.float32) + b2
    x_new = _layernorm(y + ff, ln2w, ln2b)

    x_scr[...] = x_new
    # Final module-level LayerNorm; only the last grid step's value reaches HBM
    # (output block index is constant across the layer axis).
    out_ref[...] = _layernorm(x_new, fnorm_ref[0:1], fnorm_ref[1:2])


# --------------------------- parameter packing -------------------------------
def _pack_params(params, norm_params):
    """Pack per-layer params into stacked arrays (one ref per kind). Matmul weights
    are stored in bf16 (MXU operands); biases / LN params stay f32. Call ONCE at
    init time -- this is deliberately out of the per-call path."""
    wqkv, bqkv, wo, w1, b1, w2, vec = [], [], [], [], [], [], []
    for lp in params:
        (wq, bq, wk, bk, wv, bv, wo_, bo, ln1w, ln1b,
         w1_, b1_, w2_, b2, ln2w, ln2b) = lp
        wqkv.append(jnp.concatenate([wq, wk, wv], axis=1))      # (E, 3E)
        bqkv.append(jnp.concatenate([bq, bk, bv], axis=1))      # (1, 3E)
        wo.append(wo_)                                          # (E, E)
        w1.append(w1_)                                          # (E, F)
        b1.append(b1_)                                          # (1, F)
        w2.append(w2_)                                          # (F, E)
        vec.append(jnp.stack([bo[0], ln1w[0], ln1b[0], b2[0], ln2w[0], ln2b[0]]))
    fnorm = jnp.stack([norm_params[0][0], norm_params[1][0]])   # (2, E)
    return (jnp.stack(wqkv).astype(jnp.bfloat16),   # (L, E, 3E)
            jnp.stack(bqkv),                        # (L, 1, 3E) f32
            jnp.stack(wo).astype(jnp.bfloat16),     # (L, E, E)
            jnp.stack(w1).astype(jnp.bfloat16),     # (L, E, F)
            jnp.stack(b1),                          # (L, 1, F) f32
            jnp.stack(w2).astype(jnp.bfloat16),     # (L, F, E)
            jnp.stack(vec),                         # (L, 6, E) f32
            fnorm)                                  # (2, E) f32


def transformer_encoder_pallas(src_sne, src_key_padding_mask, packed):
    """src_sne: (S, N, E) as in PyTorch; mask: (N, S) bool, True = pad.
    `packed` comes from _pack_params (computed once at init)."""
    (wqkv, bqkv, wo, w1, b1, w2, vec, fnorm) = packed
    x = jnp.transpose(src_sne, (1, 0, 2)).astype(jnp.float32).reshape(NS, E)
    bias_ns = jnp.where(src_key_padding_mask, -1e9, 0.0).astype(jnp.float32)   # (N, S)
    # One row per (head, batch) pair, matching the head-major fold used in-kernel.
    bias_full = jnp.tile(bias_ns[None, :, None, :], (H, 1, 1, 1)).reshape(NH, 1, S)

    grid_spec = pltpu.PrefetchScalarGridSpec(
        num_scalar_prefetch=0,
        grid=(NUM_LAYERS,),
        in_specs=[
            pl.BlockSpec((NS, E), lambda l: (0, 0)),            # x (consumed at l==0)
            pl.BlockSpec((NH, 1, S), lambda l: (0, 0, 0)),      # key-padding bias
            pl.BlockSpec((1, E, 3 * E), lambda l: (l, 0, 0)),   # Wqkv (bf16)
            pl.BlockSpec((1, 1, 3 * E), lambda l: (l, 0, 0)),   # bqkv
            pl.BlockSpec((1, E, E), lambda l: (l, 0, 0)),       # Wo   (bf16)
            pl.BlockSpec((1, E, F), lambda l: (l, 0, 0)),       # W1   (bf16)
            pl.BlockSpec((1, 1, F), lambda l: (l, 0, 0)),       # b1
            pl.BlockSpec((1, F, E), lambda l: (l, 0, 0)),       # W2   (bf16)
            pl.BlockSpec((1, 6, E), lambda l: (l, 0, 0)),       # bo/LN1/b2/LN2 vectors
            pl.BlockSpec((2, E), lambda l: (0, 0)),             # final-norm w/b
        ],
        out_specs=pl.BlockSpec((NS, E), lambda l: (0, 0)),
        scratch_shapes=[pltpu.VMEM((NS, E), jnp.float32)],      # residual-stream carry
    )

    out = pl.pallas_call(
        _encoder_kernel,
        out_shape=jax.ShapeDtypeStruct((NS, E), jnp.float32),
        grid_spec=grid_spec,
        compiler_params=pltpu.CompilerParams(
            dimension_semantics=("arbitrary",)),                # layer axis is sequential
        cost_estimate=pl.CostEstimate(
            flops=_FLOPS, transcendentals=_TRANS, bytes_accessed=_BYTES),
    )(x, bias_full, wqkv, bqkv, wo, w1, b1, w2, vec, fnorm)

    return jnp.transpose(out.reshape(N, S, E), (1, 0, 2))       # back to (S, N, E)


# ------------------------- pure-JAX reference (f32) --------------------------
def _layer_ref(x, mask_bias, lp):
    (wq, bq, wk, bk, wv, bv, wo, bo, ln1w, ln1b, w1, b1, w2, b2, ln2w, ln2b) = lp
    q = x @ wq + bq
    k = x @ wk + bk
    v = x @ wv + bv
    B = x.shape[0]
    qh = q.reshape(B, S, H, DH).transpose(0, 2, 1, 3)
    kh = k.reshape(B, S, H, DH).transpose(0, 2, 1, 3)
    vh = v.reshape(B, S, H, DH).transpose(0, 2, 1, 3)
    sc = jnp.einsum("bhqd,bhkd->bhqk", qh, kh) * SCALE + mask_bias[:, None, :, :]
    p = jax.nn.softmax(sc, axis=-1)
    a = jnp.einsum("bhqk,bhkd->bhqd", p, vh).transpose(0, 2, 1, 3).reshape(B, S, E)
    a = a @ wo + bo
    y = _layernorm(x + a, ln1w, ln1b)
    ff = jnp.maximum(y @ w1 + b1, 0.0) @ w2 + b2
    return _layernorm(y + ff, ln2w, ln2b)


def transformer_encoder_ref(src_sne, key_pad_mask, params, norm_params):
    x = jnp.transpose(src_sne, (1, 0, 2)).astype(jnp.float32)
    mask_bias = jnp.where(key_pad_mask, -1e9, 0.0)[:, None, :].astype(jnp.float32)
    for lp in params:
        x = _layer_ref(x, mask_bias, lp)
    x = _layernorm(x, *norm_params)
    return jnp.transpose(x, (1, 0, 2))


# ------------------------- parameter init -----------------------------------
def _init_params(key):
    params = []
    for _ in range(NUM_LAYERS):
        keys = jax.random.split(key, 9)
        key = keys[0]

        def nrm(k, shape, scale=0.05):
            return (scale * jax.random.normal(k, shape)).astype(jnp.float32)

        lp = (
            nrm(keys[1], (E, E)), jnp.zeros((1, E), jnp.float32),   # Wq^T, bq
            nrm(keys[2], (E, E)), jnp.zeros((1, E), jnp.float32),   # Wk^T, bk
            nrm(keys[3], (E, E)), jnp.zeros((1, E), jnp.float32),   # Wv^T, bv
            nrm(keys[4], (E, E)), jnp.zeros((1, E), jnp.float32),   # Wo^T, bo
            jnp.ones((1, E), jnp.float32), jnp.zeros((1, E), jnp.float32),  # LN1
            nrm(keys[5], (E, F)), jnp.zeros((1, F), jnp.float32),   # W1^T, b1
            nrm(keys[6], (F, E)), jnp.zeros((1, E), jnp.float32),   # W2^T, b2
            jnp.ones((1, E), jnp.float32), jnp.zeros((1, E), jnp.float32),  # LN2
        )
        params.append(lp)
    norm_params = (jnp.ones((1, E), jnp.float32), jnp.zeros((1, E), jnp.float32))
    return params, norm_params, key


if __name__ == "__main__":
    root = jax.random.PRNGKey(0)
    params, norm_params, root = _init_params(root)
    packed = _pack_params(params, norm_params)      # once, at init time (hoisted)

    k_src, _ = jax.random.split(root)
    src = jax.random.normal(k_src, (S, N, E), dtype=jnp.float32)     # (seq, batch, d_model)
    # Deterministic key-padding mask: last two positions of batch 1 are padding.
    key_pad_mask = jnp.zeros((N, S), dtype=bool).at[1, S - 2:].set(True)

    run = jax.jit(transformer_encoder_pallas)
    out = jax.block_until_ready(run(src, key_pad_mask, packed))

    ref = transformer_encoder_ref(src, key_pad_mask, params, norm_params)
    # Tolerance accounts for bf16 MXU operands (f32 accumulation, f32 elementwise).
    np.testing.assert_allclose(np.asarray(out), np.asarray(ref), rtol=2e-2, atol=2e-2)

    print("KERNEL_OK")
</pallas_src>

<mosaic_0001>
module attributes {stable_mosaic.version = 11 : i64} {
  func.func @_encoder_kernel(%arg0: i32, %arg1: memref<16x32xf32, #tpu.memory_space<vmem>>, %arg2: memref<8x1x8xf32, #tpu.memory_space<vmem>>, %arg3: memref<1x32x96xbf16, #tpu.memory_space<vmem>>, %arg4: memref<1x1x96xf32, #tpu.memory_space<vmem>>, %arg5: memref<1x32x32xbf16, #tpu.memory_space<vmem>>, %arg6: memref<1x32x64xbf16, #tpu.memory_space<vmem>>, %arg7: memref<1x1x64xf32, #tpu.memory_space<vmem>>, %arg8: memref<1x64x32xbf16, #tpu.memory_space<vmem>>, %arg9: memref<1x6x32xf32, #tpu.memory_space<vmem>>, %arg10: memref<2x32xf32, #tpu.memory_space<vmem>>, %arg11: memref<16x32xf32, #tpu.memory_space<vmem>>, %arg12: memref<16x32xf32, #tpu.memory_space<vmem>>) attributes {dimension_semantics = [#tpu.dimension_semantics<arbitrary>], iteration_bounds = array<i64: 2>, scalar_prefetch = 0 : i64, scratch_operands = 1 : i64, tpu.core_type = #tpu.core_type<tc>, window_params = [{pipeline_mode = #tpu.pipeline_mode<synchronous>, transform_indices = @transform_0, window_bounds = array<i64: 16, 32>}, {pipeline_mode = #tpu.pipeline_mode<synchronous>, transform_indices = @transform_1, window_bounds = array<i64: 8, 1, 8>}, {transform_indices = @transform_2, window_bounds = array<i64: 1, 32, 96>}, {transform_indices = @transform_3, window_bounds = array<i64: 1, 1, 96>}, {transform_indices = @transform_4, window_bounds = array<i64: 1, 32, 32>}, {transform_indices = @transform_5, window_bounds = array<i64: 1, 32, 64>}, {transform_indices = @transform_6, window_bounds = array<i64: 1, 1, 64>}, {transform_indices = @transform_7, window_bounds = array<i64: 1, 64, 32>}, {transform_indices = @transform_8, window_bounds = array<i64: 1, 6, 32>}, {pipeline_mode = #tpu.pipeline_mode<synchronous>, transform_indices = @transform_9, window_bounds = array<i64: 2, 32>}, {pipeline_mode = #tpu.pipeline_mode<synchronous>, transform_indices = @transform_10, window_bounds = array<i64: 16, 32>}]} {
    %c0_i32 = arith.constant 0 : i32
    %0 = arith.cmpi eq, %arg0, %c0_i32 : i32
    %1 = arith.extui %0 : i1 to i32
    %c0_i32_0 = arith.constant 0 : i32
    %2 = arith.cmpi ne, %1, %c0_i32_0 : i32
    scf.if %2 {
      %c0_57 = arith.constant 0 : index
      %c0_58 = arith.constant 0 : index
      %200 = vector.load %arg1[%c0_57, %c0_58] : memref<16x32xf32, #tpu.memory_space<vmem>>, vector<16x32xf32>
      %c0_59 = arith.constant 0 : index
      %c0_60 = arith.constant 0 : index
      %201 = vector.load %arg12[%c0_59, %c0_60] : memref<16x32xf32, #tpu.memory_space<vmem>>, vector<16x32xf32>
      tpu.vector_store %arg12[%c0_59, %c0_60], %200 {strides = array<i32>} : memref<16x32xf32, #tpu.memory_space<vmem>>, vector<16x32xf32>,
    } else {
    }
    %c0 = arith.constant 0 : index
    %c0_1 = arith.constant 0 : index
    %3 = vector.load %arg12[%c0, %c0_1] : memref<16x32xf32, #tpu.memory_space<vmem>>, vector<16x32xf32>
    %c0_2 = arith.constant 0 : index
    %c0_3 = arith.constant 0 : index
    %c0_4 = arith.constant 0 : index
    %4 = vector.load %arg9[%c0_2, %c0_3, %c0_4] : memref<1x6x32xf32, #tpu.memory_space<vmem>>, vector<1x6x32xf32>
    %5 = vector.shape_cast %4 : vector<1x6x32xf32> to vector<6x32xf32>
    %6 = vector.extract_strided_slice %5 {offsets = [0, 0], sizes = [1, 32], strides = [1, 1]} : vector<6x32xf32> to vector<1x32xf32>
    %7 = vector.extract_strided_slice %5 {offsets = [1, 0], sizes = [1, 32], strides = [1, 1]} : vector<6x32xf32> to vector<1x32xf32>
    %8 = vector.extract_strided_slice %5 {offsets = [2, 0], sizes = [1, 32], strides = [1, 1]} : vector<6x32xf32> to vector<1x32xf32>
    %9 = vector.extract_strided_slice %5 {offsets = [3, 0], sizes = [1, 32], strides = [1, 1]} : vector<6x32xf32> to vector<1x32xf32>
    %10 = vector.extract_strided_slice %5 {offsets = [4, 0], sizes = [1, 32], strides = [1, 1]} : vector<6x32xf32> to vector<1x32xf32>
    %11 = vector.extract_strided_slice %5 {offsets = [5, 0], sizes = [1, 32], strides = [1, 1]} : vector<6x32xf32> to vector<1x32xf32>
    %12 = arith.truncf %3 : vector<16x32xf32> to vector<16x32xbf16>
    %c0_5 = arith.constant 0 : index
    %c0_6 = arith.constant 0 : index
    %c0_7 = arith.constant 0 : index
    %13 = vector.load %arg3[%c0_5, %c0_6, %c0_7] : memref<1x32x96xbf16, #tpu.memory_space<vmem>>, vector<1x32x96xbf16>
    %14 = vector.shape_cast %13 : vector<1x32x96xbf16> to vector<32x96xbf16>
    %cst = arith.constant dense<0.000000e+00> : vector<16x96xf32>
    %15 = tpu.matmul %12, %14, %cst {dimension_numbers = #tpu.dot_dimension_numbers<[1], [0], [0], [1], [0, 0, 1, 1], [], []>} : vector<16x32xbf16>, vector<32x96xbf16>, vector<16x96xf32> -> vector<16x96xf32>
    %c0_8 = arith.constant 0 : index
    %c0_9 = arith.constant 0 : index
    %c0_10 = arith.constant 0 : index
    %16 = vector.load %arg4[%c0_8, %c0_9, %c0_10] : memref<1x1x96xf32, #tpu.memory_space<vmem>>, vector<1x1x96xf32>
    %17 = vector.shape_cast %16 : vector<1x1x96xf32> to vector<1x96xf32>
    %18 = vector.broadcast %17 : vector<1x96xf32> to vector<16x96xf32>
    %19 = arith.addf %15, %18 : vector<16x96xf32>
    %20 = vector.extract_strided_slice %19 {offsets = [0, 0], sizes = [16, 32], strides = [1, 1]} : vector<16x96xf32> to vector<16x32xf32>
    %21 = vector.extract_strided_slice %20 {offsets = [0, 0], sizes = [16, 8], strides = [1, 1]} : vector<16x32xf32> to vector<16x8xf32>
    %22 = vector.shape_cast %21 : vector<16x8xf32> to vector<2x8x8xf32>
    %23 = vector.extract_strided_slice %20 {offsets = [0, 8], sizes = [16, 8], strides = [1, 1]} : vector<16x32xf32> to vector<16x8xf32>
    %24 = vector.shape_cast %23 : vector<16x8xf32> to vector<2x8x8xf32>
    %25 = vector.extract_strided_slice %20 {offsets = [0, 16], sizes = [16, 8], strides = [1, 1]} : vector<16x32xf32> to vector<16x8xf32>
    %26 = vector.shape_cast %25 : vector<16x8xf32> to vector<2x8x8xf32>
    %27 = vector.extract_strided_slice %20 {offsets = [0, 24], sizes = [16, 8], strides = [1, 1]} : vector<16x32xf32> to vector<16x8xf32>
    %28 = vector.shape_cast %27 : vector<16x8xf32> to vector<2x8x8xf32>
    %29 = vector.shape_cast %22 : vector<2x8x8xf32> to vector<1x2x8x8xf32>
    %30 = vector.shape_cast %24 : vector<2x8x8xf32> to vector<1x2x8x8xf32>
    %31 = vector.shape_cast %26 : vector<2x8x8xf32> to vector<1x2x8x8xf32>
    %32 = vector.shape_cast %28 : vector<2x8x8xf32> to vector<1x2x8x8xf32>
    %33 = tpu.concatenate %29, %30, %31, %32 in 0 : vector<1x2x8x8xf32>, vector<1x2x8x8xf32>, vector<1x2x8x8xf32>, vector<1x2x8x8xf32> -> vector<4x2x8x8xf32>
    %34 = vector.shape_cast %33 : vector<4x2x8x8xf32> to vector<8x8x8xf32>
    %35 = vector.extract_strided_slice %19 {offsets = [0, 32], sizes = [16, 32], strides = [1, 1]} : vector<16x96xf32> to vector<16x32xf32>
    %36 = vector.extract_strided_slice %35 {offsets = [0, 0], sizes = [16, 8], strides = [1, 1]} : vector<16x32xf32> to vector<16x8xf32>
    %37 = vector.shape_cast %36 : vector<16x8xf32> to vector<2x8x8xf32>
    %38 = vector.extract_strided_slice %35 {offsets = [0, 8], sizes = [16, 8], strides = [1, 1]} : vector<16x32xf32> to vector<16x8xf32>
    %39 = vector.shape_cast %38 : vector<16x8xf32> to vector<2x8x8xf32>
    %40 = vector.extract_strided_slice %35 {offsets = [0, 16], sizes = [16, 8], strides = [1, 1]} : vector<16x32xf32> to vector<16x8xf32>
    %41 = vector.shape_cast %40 : vector<16x8xf32> to vector<2x8x8xf32>
    %42 = vector.extract_strided_slice %35 {offsets = [0, 24], sizes = [16, 8], strides = [1, 1]} : vector<16x32xf32> to vector<16x8xf32>
    %43 = vector.shape_cast %42 : vector<16x8xf32> to vector<2x8x8xf32>
    %44 = vector.shape_cast %37 : vector<2x8x8xf32> to vector<1x2x8x8xf32>
    %45 = vector.shape_cast %39 : vector<2x8x8xf32> to vector<1x2x8x8xf32>
    %46 = vector.shape_cast %41 : vector<2x8x8xf32> to vector<1x2x8x8xf32>
    %47 = vector.shape_cast %43 : vector<2x8x8xf32> to vector<1x2x8x8xf32>
    %48 = tpu.concatenate %44, %45, %46, %47 in 0 : vector<1x2x8x8xf32>, vector<1x2x8x8xf32>, vector<1x2x8x8xf32>, vector<1x2x8x8xf32> -> vector<4x2x8x8xf32>
    %49 = vector.shape_cast %48 : vector<4x2x8x8xf32> to vector<8x8x8xf32>
    %50 = vector.extract_strided_slice %19 {offsets = [0, 64], sizes = [16, 32], strides = [1, 1]} : vector<16x96xf32> to vector<16x32xf32>
    %51 = vector.extract_strided_slice %50 {offsets = [0, 0], sizes = [16, 8], strides = [1, 1]} : vector<16x32xf32> to vector<16x8xf32>
    %52 = vector.shape_cast %51 : vector<16x8xf32> to vector<2x8x8xf32>
    %53 = vector.extract_strided_slice %50 {offsets = [0, 8], sizes = [16, 8], strides = [1, 1]} : vector<16x32xf32> to vector<16x8xf32>
    %54 = vector.shape_cast %53 : vector<16x8xf32> to vector<2x8x8xf32>
    %55 = vector.extract_strided_slice %50 {offsets = [0, 16], sizes = [16, 8], strides = [1, 1]} : vector<16x32xf32> to vector<16x8xf32>
    %56 = vector.shape_cast %55 : vector<16x8xf32> to vector<2x8x8xf32>
    %57 = vector.extract_strided_slice %50 {offsets = [0, 24], sizes = [16, 8], strides = [1, 1]} : vector<16x32xf32> to vector<16x8xf32>
    %58 = vector.shape_cast %57 : vector<16x8xf32> to vector<2x8x8xf32>
    %59 = vector.shape_cast %52 : vector<2x8x8xf32> to vector<1x2x8x8xf32>
    %60 = vector.shape_cast %54 : vector<2x8x8xf32> to vector<1x2x8x8xf32>
    %61 = vector.shape_cast %56 : vector<2x8x8xf32> to vector<1x2x8x8xf32>
    %62 = vector.shape_cast %58 : vector<2x8x8xf32> to vector<1x2x8x8xf32>
    %63 = tpu.concatenate %59, %60, %61, %62 in 0 : vector<1x2x8x8xf32>, vector<1x2x8x8xf32>, vector<1x2x8x8xf32>, vector<1x2x8x8xf32> -> vector<4x2x8x8xf32>
    %64 = vector.shape_cast %63 : vector<4x2x8x8xf32> to vector<8x8x8xf32>
    %65 = arith.truncf %34 : vector<8x8x8xf32> to vector<8x8x8xbf16>
    %66 = arith.truncf %49 : vector<8x8x8xf32> to vector<8x8x8xbf16>
    "tpu.trace_start"() <{level = 10 : i32, message = "bqd,bkd->bqk"}> : () -> ()
    %cst_11 = arith.constant dense<0.000000e+00> : vector<8x8x8xf32>
    %67 = tpu.matmul %65, %66, %cst_11 {dimension_numbers = #tpu.dot_dimension_numbers<[2], [2], [1], [1], [0, 0, 0, 1, 1, 1], [0], [0]>} : vector<8x8x8xbf16>, vector<8x8x8xbf16>, vector<8x8x8xf32> -> vector<8x8x8xf32>
    "tpu.trace_stop"() : () -> ()
    %cst_12 = arith.constant 0.353553385 : f32
    %68 = vector.broadcast %cst_12 : f32 to vector<8x8x8xf32>
    %69 = arith.mulf %67, %68 : vector<8x8x8xf32>
    %c0_13 = arith.constant 0 : index
    %c0_14 = arith.constant 0 : index
    %c0_15 = arith.constant 0 : index
    %70 = vector.load %arg2[%c0_13, %c0_14, %c0_15] : memref<8x1x8xf32, #tpu.memory_space<vmem>>, vector<8x1x8xf32>
    %71 = vector.broadcast %70 : vector<8x1x8xf32> to vector<8x8x8xf32>
    %72 = arith.addf %69, %71 : vector<8x8x8xf32>
    %cst_16 = arith.constant dense<0xFF800000> : vector<8x8xf32>
    %73 = vector.multi_reduction <maximumf>, %72, %cst_16 [2] : vector<8x8x8xf32> to vector<8x8xf32>
    %74 = vector.shape_cast %73 : vector<8x8xf32> to vector<8x8x1xf32>
    %75 = vector.broadcast %74 : vector<8x8x1xf32> to vector<8x8x8xf32>
    %76 = arith.subf %72, %75 : vector<8x8x8xf32>
    %77 = math.exp %76 : vector<8x8x8xf32>
    %cst_17 = arith.constant dense<0.000000e+00> : vector<8x8xf32>
    %78 = vector.multi_reduction <add>, %77, %cst_17 [2] : vector<8x8x8xf32> to vector<8x8xf32>
    %79 = vector.shape_cast %78 : vector<8x8xf32> to vector<8x8x1xf32>
    %80 = tpu.reciprocal %79 : vector<8x8x1xf32> -> vector<8x8x1xf32>
    %81 = vector.broadcast %80 : vector<8x8x1xf32> to vector<8x8x8xf32>
    %82 = arith.mulf %77, %81 : vector<8x8x8xf32>
    %83 = arith.truncf %82 : vector<8x8x8xf32> to vector<8x8x8xbf16>
    %84 = arith.truncf %64 : vector<8x8x8xf32> to vector<8x8x8xbf16>
    "tpu.trace_start"() <{level = 10 : i32, message = "bqk,bkd->bqd"}> : () -> ()
    %cst_18 = arith.constant dense<0.000000e+00> : vector<8x8x8xf32>
    %85 = tpu.matmul %83, %84, %cst_18 {dimension_numbers = #tpu.dot_dimension_numbers<[2], [1], [1], [2], [0, 0, 0, 1, 1, 2], [0], [0]>} : vector<8x8x8xbf16>, vector<8x8x8xbf16>, vector<8x8x8xf32> -> vector<8x8x8xf32>
    "tpu.trace_stop"() : () -> ()
    %86 = vector.shape_cast %85 : vector<8x8x8xf32> to vector<4x2x8x8xf32>
    %87 = vector.extract_strided_slice %86 {offsets = [0, 0, 0, 0], sizes = [1, 2, 8, 8], strides = [1, 1, 1, 1]} : vector<4x2x8x8xf32> to vector<1x2x8x8xf32>
    %88 = vector.shape_cast %87 : vector<1x2x8x8xf32> to vector<2x8x8xf32>
    %89 = vector.shape_cast %88 : vector<2x8x8xf32> to vector<16x8xf32>
    %90 = vector.extract_strided_slice %86 {offsets = [1, 0, 0, 0], sizes = [1, 2, 8, 8], strides = [1, 1, 1, 1]} : vector<4x2x8x8xf32> to vector<1x2x8x8xf32>
    %91 = vector.shape_cast %90 : vector<1x2x8x8xf32> to vector<2x8x8xf32>
    %92 = vector.shape_cast %91 : vector<2x8x8xf32> to vector<16x8xf32>
    %93 = vector.extract_strided_slice %86 {offsets = [2, 0, 0, 0], sizes = [1, 2, 8, 8], strides = [1, 1, 1, 1]} : vector<4x2x8x8xf32> to vector<1x2x8x8xf32>
    %94 = vector.shape_cast %93 : vector<1x2x8x8xf32> to vector<2x8x8xf32>
    %95 = vector.shape_cast %94 : vector<2x8x8xf32> to vector<16x8xf32>
    %96 = vector.extract_strided_slice %86 {offsets = [3, 0, 0, 0], sizes = [1, 2, 8, 8], strides = [1, 1, 1, 1]} : vector<4x2x8x8xf32> to vector<1x2x8x8xf32>
    %97 = vector.shape_cast %96 : vector<1x2x8x8xf32> to vector<2x8x8xf32>
    %98 = vector.shape_cast %97 : vector<2x8x8xf32> to vector<16x8xf32>
    %99 = tpu.concatenate %89, %92, %95, %98 in 1 : vector<16x8xf32>, vector<16x8xf32>, vector<16x8xf32>, vector<16x8xf32> -> vector<16x32xf32>
    %100 = arith.truncf %99 : vector<16x32xf32> to vector<16x32xbf16>
    %c0_19 = arith.constant 0 : index
    %c0_20 = arith.constant 0 : index
    %c0_21 = arith.constant 0 : index
    %101 = vector.load %arg5[%c0_19, %c0_20, %c0_21] : memref<1x32x32xbf16, #tpu.memory_space<vmem>>, vector<1x32x32xbf16>
    %102 = vector.shape_cast %101 : vector<1x32x32xbf16> to vector<32x32xbf16>
    %cst_22 = arith.constant dense<0.000000e+00> : vector<16x32xf32>
    %103 = tpu.matmul %100, %102, %cst_22 {dimension_numbers = #tpu.dot_dimension_numbers<[1], [0], [0], [1], [0, 0, 1, 1], [], []>} : vector<16x32xbf16>, vector<32x32xbf16>, vector<16x32xf32> -> vector<16x32xf32>
    %104 = vector.broadcast %6 : vector<1x32xf32> to vector<16x32xf32>
    %105 = arith.addf %103, %104 : vector<16x32xf32>
    %106 = arith.addf %3, %105 : vector<16x32xf32>
    %cst_23 = arith.constant dense<0.000000e+00> : vector<16xf32>
    %107 = vector.multi_reduction <add>, %106, %cst_23 [1] : vector<16x32xf32> to vector<16xf32>
    %108 = vector.shape_cast %107 : vector<16xf32> to vector<16x1xf32>
    %cst_24 = arith.constant 3.200000e+01 : f32
    %109 = vector.broadcast %cst_24 : f32 to vector<16x1xf32>
    %110 = arith.divf %108, %109 : vector<16x1xf32>
    %111 = vector.broadcast %110 : vector<16x1xf32> to vector<16x32xf32>
    %112 = arith.subf %106, %111 : vector<16x32xf32>
    %113 = vector.broadcast %110 : vector<16x1xf32> to vector<16x32xf32>
    %114 = arith.subf %106, %113 : vector<16x32xf32>
    %115 = arith.mulf %112, %114 : vector<16x32xf32>
    %cst_25 = arith.constant dense<0.000000e+00> : vector<16xf32>
    %116 = vector.multi_reduction <add>, %115, %cst_25 [1] : vector<16x32xf32> to vector<16xf32>
    %117 = vector.shape_cast %116 : vector<16xf32> to vector<16x1xf32>
    %cst_26 = arith.constant 3.200000e+01 : f32
    %118 = vector.broadcast %cst_26 : f32 to vector<16x1xf32>
    %119 = arith.divf %117, %118 : vector<16x1xf32>
    %120 = vector.broadcast %110 : vector<16x1xf32> to vector<16x32xf32>
    %121 = arith.subf %106, %120 : vector<16x32xf32>
    %cst_27 = arith.constant 9.99999974E-6 : f32
    %122 = vector.broadcast %cst_27 : f32 to vector<16x1xf32>
    %123 = arith.addf %119, %122 : vector<16x1xf32>
    %124 = math.rsqrt %123 : vector<16x1xf32>
    %125 = vector.broadcast %124 : vector<16x1xf32> to vector<16x32xf32>
    %126 = arith.mulf %121, %125 : vector<16x32xf32>
    %127 = vector.broadcast %7 : vector<1x32xf32> to vector<16x32xf32>
    %128 = arith.mulf %126, %127 : vector<16x32xf32>
    %129 = vector.broadcast %8 : vector<1x32xf32> to vector<16x32xf32>
    %130 = arith.addf %128, %129 : vector<16x32xf32>
    %131 = arith.truncf %130 : vector<16x32xf32> to vector<16x32xbf16>
    %c0_28 = arith.constant 0 : index
    %c0_29 = arith.constant 0 : index
    %c0_30 = arith.constant 0 : index
    %132 = vector.load %arg6[%c0_28, %c0_29, %c0_30] : memref<1x32x64xbf16, #tpu.memory_space<vmem>>, vector<1x32x64xbf16>
    %133 = vector.shape_cast %132 : vector<1x32x64xbf16> to vector<32x64xbf16>
    %cst_31 = arith.constant dense<0.000000e+00> : vector<16x64xf32>
    %134 = tpu.matmul %131, %133, %cst_31 {dimension_numbers = #tpu.dot_dimension_numbers<[1], [0], [0], [1], [0, 0, 1, 1], [], []>} : vector<16x32xbf16>, vector<32x64xbf16>, vector<16x64xf32> -> vector<16x64xf32>
    %c0_32 = arith.constant 0 : index
    %c0_33 = arith.constant 0 : index
    %c0_34 = arith.constant 0 : index
    %135 = vector.load %arg7[%c0_32, %c0_33, %c0_34] : memref<1x1x64xf32, #tpu.memory_space<vmem>>, vector<1x1x64xf32>
    %136 = vector.shape_cast %135 : vector<1x1x64xf32> to vector<1x64xf32>
    %137 = vector.broadcast %136 : vector<1x64xf32> to vector<16x64xf32>
    %138 = arith.addf %134, %137 : vector<16x64xf32>
    %cst_35 = arith.constant 0.000000e+00 : f32
    %139 = vector.broadcast %cst_35 : f32 to vector<16x64xf32>
    %140 = arith.maximumf %138, %139 : vector<16x64xf32>
    %141 = arith.truncf %140 : vector<16x64xf32> to vector<16x64xbf16>
    %c0_36 = arith.constant 0 : index
    %c0_37 = arith.constant 0 : index
    %c0_38 = arith.constant 0 : index
    %142 = vector.load %arg8[%c0_36, %c0_37, %c0_38] : memref<1x64x32xbf16, #tpu.memory_space<vmem>>, vector<1x64x32xbf16>
    %143 = vector.shape_cast %142 : vector<1x64x32xbf16> to vector<64x32xbf16>
    %cst_39 = arith.constant dense<0.000000e+00> : vector<16x32xf32>
    %144 = tpu.matmul %141, %143, %cst_39 {dimension_numbers = #tpu.dot_dimension_numbers<[1], [0], [0], [1], [0, 0, 1, 1], [], []>} : vector<16x64xbf16>, vector<64x32xbf16>, vector<16x32xf32> -> vector<16x32xf32>
    %145 = vector.broadcast %9 : vector<1x32xf32> to vector<16x32xf32>
    %146 = arith.addf %144, %145 : vector<16x32xf32>
    %147 = arith.addf %130, %146 : vector<16x32xf32>
    %cst_40 = arith.constant dense<0.000000e+00> : vector<16xf32>
    %148 = vector.multi_reduction <add>, %147, %cst_40 [1] : vector<16x32xf32> to vector<16xf32>
    %149 = vector.shape_cast %148 : vector<16xf32> to vector<16x1xf32>
    %cst_41 = arith.constant 3.200000e+01 : f32
    %150 = vector.broadcast %cst_41 : f32 to vector<16x1xf32>
    %151 = arith.divf %149, %150 : vector<16x1xf32>
    %152 = vector.broadcast %151 : vector<16x1xf32> to vector<16x32xf32>
    %153 = arith.subf %147, %152 : vector<16x32xf32>
    %154 = vector.broadcast %151 : vector<16x1xf32> to vector<16x32xf32>
    %155 = arith.subf %147, %154 : vector<16x32xf32>
    %156 = arith.mulf %153, %155 : vector<16x32xf32>
    %cst_42 = arith.constant dense<0.000000e+00> : vector<16xf32>
    %157 = vector.multi_reduction <add>, %156, %cst_42 [1] : vector<16x32xf32> to vector<16xf32>
    %158 = vector.shape_cast %157 : vector<16xf32> to vector<16x1xf32>
    %cst_43 = arith.constant 3.200000e+01 : f32
    %159 = vector.broadcast %cst_43 : f32 to vector<16x1xf32>
    %160 = arith.divf %158, %159 : vector<16x1xf32>
    %161 = vector.broadcast %151 : vector<16x1xf32> to vector<16x32xf32>
    %162 = arith.subf %147, %161 : vector<16x32xf32>
    %cst_44 = arith.constant 9.99999974E-6 : f32
    %163 = vector.broadcast %cst_44 : f32 to vector<16x1xf32>
    %164 = arith.addf %160, %163 : vector<16x1xf32>
    %165 = math.rsqrt %164 : vector<16x1xf32>
    %166 = vector.broadcast %165 : vector<16x1xf32> to vector<16x32xf32>
    %167 = arith.mulf %162, %166 : vector<16x32xf32>
    %168 = vector.broadcast %10 : vector<1x32xf32> to vector<16x32xf32>
    %169 = arith.mulf %167, %168 : vector<16x32xf32>
    %170 = vector.broadcast %11 : vector<1x32xf32> to vector<16x32xf32>
    %171 = arith.addf %169, %170 : vector<16x32xf32>
    %c0_45 = arith.constant 0 : index
    %c0_46 = arith.constant 0 : index
    %172 = vector.load %arg12[%c0_45, %c0_46] : memref<16x32xf32, #tpu.memory_space<vmem>>, vector<16x32xf32>
    tpu.vector_store %arg12[%c0_45, %c0_46], %171 {strides = array<i32>} : memref<16x32xf32, #tpu.memory_space<vmem>>, vector<16x32xf32>,
    %c0_47 = arith.constant 0 : index
    %c0_48 = arith.constant 0 : index
    %173 = vector.load %arg10[%c0_47, %c0_48] : memref<2x32xf32, #tpu.memory_space<vmem>>, vector<1x32xf32>
    %c1 = arith.constant 1 : index
    %c0_49 = arith.constant 0 : index
    %174 = vector.load %arg10[%c1, %c0_49] : memref<2x32xf32, #tpu.memory_space<vmem>>, vector<1x32xf32>
    %cst_50 = arith.constant dense<0.000000e+00> : vector<16xf32>
    %175 = vector.multi_reduction <add>, %171, %cst_50 [1] : vector<16x32xf32> to vector<16xf32>
    %176 = vector.shape_cast %175 : vector<16xf32> to vector<16x1xf32>
    %cst_51 = arith.constant 3.200000e+01 : f32
    %177 = vector.broadcast %cst_51 : f32 to vector<16x1xf32>
    %178 = arith.divf %176, %177 : vector<16x1xf32>
    %179 = vector.broadcast %178 : vector<16x1xf32> to vector<16x32xf32>
    %180 = arith.subf %171, %179 : vector<16x32xf32>
    %181 = vector.broadcast %178 : vector<16x1xf32> to vector<16x32xf32>
    %182 = arith.subf %171, %181 : vector<16x32xf32>
    %183 = arith.mulf %180, %182 : vector<16x32xf32>
    %cst_52 = arith.constant dense<0.000000e+00> : vector<16xf32>
    %184 = vector.multi_reduction <add>, %183, %cst_52 [1] : vector<16x32xf32> to vector<16xf32>
    %185 = vector.shape_cast %184 : vector<16xf32> to vector<16x1xf32>
    %cst_53 = arith.constant 3.200000e+01 : f32
    %186 = vector.broadcast %cst_53 : f32 to vector<16x1xf32>
    %187 = arith.divf %185, %186 : vector<16x1xf32>
    %188 = vector.broadcast %178 : vector<16x1xf32> to vector<16x32xf32>
    %189 = arith.subf %171, %188 : vector<16x32xf32>
    %cst_54 = arith.constant 9.99999974E-6 : f32
    %190 = vector.broadcast %cst_54 : f32 to vector<16x1xf32>
    %191 = arith.addf %187, %190 : vector<16x1xf32>
    %192 = math.rsqrt %191 : vector<16x1xf32>
    %193 = vector.broadcast %192 : vector<16x1xf32> to vector<16x32xf32>
    %194 = arith.mulf %189, %193 : vector<16x32xf32>
    %195 = vector.broadcast %173 : vector<1x32xf32> to vector<16x32xf32>
    %196 = arith.mulf %194, %195 : vector<16x32xf32>
    %197 = vector.broadcast %174 : vector<1x32xf32> to vector<16x32xf32>
    %198 = arith.addf %196, %197 : vector<16x32xf32>
    %c0_55 = arith.constant 0 : index
    %c0_56 = arith.constant 0 : index
    %199 = vector.load %arg11[%c0_55, %c0_56] : memref<16x32xf32, #tpu.memory_space<vmem>>, vector<16x32xf32>
    tpu.vector_store %arg11[%c0_55, %c0_56], %198 {strides = array<i32>} : memref<16x32xf32, #tpu.memory_space<vmem>>, vector<16x32xf32>,
    return
  }
  func.func @transform_0(%arg0: i32) -> (i32, i32) {
    %c0_i32 = arith.constant 0 : i32
    %c0_i32_0 = arith.constant 0 : i32
    %c0_i32_1 = arith.constant 0 : i32
    return %c0_i32, %c0_i32_0 : i32, i32
  }
  func.func @transform_1(%arg0: i32) -> (i32, i32, i32) {
    %c0_i32 = arith.constant 0 : i32
    %c0_i32_0 = arith.constant 0 : i32
    %c0_i32_1 = arith.constant 0 : i32
    %c0_i32_2 = arith.constant 0 : i32
    return %c0_i32, %c0_i32_0, %c0_i32_1 : i32, i32, i32
  }
  func.func @transform_2(%arg0: i32) -> (i32, i32, i32) {
    %c0_i32 = arith.constant 0 : i32
    %c0_i32_0 = arith.constant 0 : i32
    %c0_i32_1 = arith.constant 0 : i32
    return %arg0, %c0_i32, %c0_i32_0 : i32, i32, i32
  }
  func.func @transform_3(%arg0: i32) -> (i32, i32, i32) {
    %c0_i32 = arith.constant 0 : i32
    %c0_i32_0 = arith.constant 0 : i32
    %c0_i32_1 = arith.constant 0 : i32
    return %arg0, %c0_i32, %c0_i32_0 : i32, i32, i32
  }
  func.func @transform_4(%arg0: i32) -> (i32, i32, i32) {
    %c0_i32 = arith.constant 0 : i32
    %c0_i32_0 = arith.constant 0 : i32
    %c0_i32_1 = arith.constant 0 : i32
    return %arg0, %c0_i32, %c0_i32_0 : i32, i32, i32
  }
  func.func @transform_5(%arg0: i32) -> (i32, i32, i32) {
    %c0_i32 = arith.constant 0 : i32
    %c0_i32_0 = arith.constant 0 : i32
    %c0_i32_1 = arith.constant 0 : i32
    return %arg0, %c0_i32, %c0_i32_0 : i32, i32, i32
  }
  func.func @transform_6(%arg0: i32) -> (i32, i32, i32) {
    %c0_i32 = arith.constant 0 : i32
    %c0_i32_0 = arith.constant 0 : i32
    %c0_i32_1 = arith.constant 0 : i32
    return %arg0, %c0_i32, %c0_i32_0 : i32, i32, i32
  }
  func.func @transform_7(%arg0: i32) -> (i32, i32, i32) {
    %c0_i32 = arith.constant 0 : i32
    %c0_i32_0 = arith.constant 0 : i32
    %c0_i32_1 = arith.constant 0 : i32
    return %arg0, %c0_i32, %c0_i32_0 : i32, i32, i32
  }
  func.func @transform_8(%arg0: i32) -> (i32, i32, i32) {
    %c0_i32 = arith.constant 0 : i32
    %c0_i32_0 = arith.constant 0 : i32
    %c0_i32_1 = arith.constant 0 : i32
    return %arg0, %c0_i32, %c0_i32_0 : i32, i32, i32
  }
  func.func @transform_9(%arg0: i32) -> (i32, i32) {
    %c0_i32 = arith.constant 0 : i32
    %c0_i32_0 = arith.constant 0 : i32
    %c0_i32_1 = arith.constant 0 : i32
    return %c0_i32, %c0_i32_0 : i32, i32
  }
  func.func @transform_10(%arg0: i32) -> (i32, i32) {
    %c0_i32 = arith.constant 0 : i32
    %c0_i32_0 = arith.constant 0 : i32
    %c0_i32_1 = arith.constant 0 : i32
    return %c0_i32, %c0_i32_0 : i32, i32
  }
}

</mosaic_0001>

<llo_original>
// kernel: transformer_encoder_pallas.1
$region0: #{transformer_encoder_pallas.1}
  #allocation0 [shape = 'u32[]', space=smem, size = 0x4, offset = 0x4, fixed_abs, tag = 'smem constant byte address 0x4 - core index']
  #allocation1 [shape = 'u32[144,128]{1,0:T(1,128)}', space=vmem, size = 0x12000, scoped, tag = 'internal scratch']
  #allocation2 [shape = 'f32[16,32]{1,0:T(8,128)}', space=vmem, size = 0x2000, scoped, tag = 'scratch operand']
  %s0 = inlined_call_operand.vmem [shape: f32[16,32], index: 0, kind: input, shape index: {}]
  %s1 = inlined_call_operand.vmem [shape: f32[8,1,8], index: 1, kind: input, shape index: {}]
  %s2 = inlined_call_operand.vmem [shape: bf16[2,32,96], index: 2, kind: input, shape index: {}]
  %s3 = inlined_call_operand.vmem [shape: f32[2,1,96], index: 3, kind: input, shape index: {}]
  %s4 = inlined_call_operand.vmem [shape: bf16[2,32,32], index: 4, kind: input, shape index: {}]
  %s5 = inlined_call_operand.vmem [shape: bf16[2,32,64], index: 5, kind: input, shape index: {}]
  %s6 = inlined_call_operand.vmem [shape: f32[2,1,64], index: 6, kind: input, shape index: {}]
  %s7 = inlined_call_operand.vmem [shape: bf16[2,64,32], index: 7, kind: input, shape index: {}]
  %s8 = inlined_call_operand.vmem [shape: f32[2,6,32], index: 8, kind: input, shape index: {}]
  %s9 = inlined_call_operand.vmem [shape: f32[2,32], index: 9, kind: input, shape index: {}]
  %s10 = inlined_call_operand.vmem [shape: f32[16,32], index: 10, kind: output, shape index: {}]
  %s11 = sld [smem:[#allocation0]]
  $region77: #{transformer_encoder_pallas.1} parent=0
    _
  %s13 = ssub.s32 1, %s11
  %s14 = scalar_select 0, %s13, %s11
  loop: start=0, step=1, limit=4
  $region2: #{transformer_encoder_pallas.1} parent=0 // loop_pre_header
    _
  $region3: #{transformer_encoder_pallas.1} parent=0 // loop_header
    %s16 = sphi 0, %s20
    %p17 = scmp.ge.s32.totalorder %s16, 4
    %s24 = sphi 0, %s24
    %s26 = sphi 0, %s24
    %s27 = sphi 0, %s26
    %s41 = sphi 0, %s27
    %s45 = sphi 0, %s45
    %s47 = sphi 0, %s45
    %s48 = sphi 0, %s47
    %s62 = sphi 0, %s48
    %s68 = sphi 0, %s70
    %s71 = sphi 0, %s68
    %s72 = sphi 0, %s71
    %s88 = sphi 0, %s72
    %s94 = sphi 0, %s96
    %s97 = sphi 0, %s94
    %s98 = sphi 0, %s97
    %s114 = sphi 0, %s98
    %s120 = sphi 0, %s122
    %s123 = sphi 0, %s120
    %s124 = sphi 0, %s123
    %s140 = sphi 0, %s124
    %s146 = sphi 0, %s148
    %s149 = sphi 0, %s146
    %s150 = sphi 0, %s149
    %s166 = sphi 0, %s150
    %s172 = sphi 0, %s174
    %s175 = sphi 0, %s172
    %s176 = sphi 0, %s175
    %s192 = sphi 0, %s176
    %s198 = sphi 0, %s200
    %s201 = sphi 0, %s198
    %s202 = sphi 0, %s201
    %s218 = sphi 0, %s202
    %s224 = sphi 0, %s226
    %s227 = sphi 0, %s224
    %s228 = sphi 0, %s227
    %s244 = sphi 0, %s228
    %s248 = sphi 0, %s248
    %s250 = sphi 0, %s248
    %s251 = sphi 0, %s250
    %s265 = sphi 0, %s251
    %s269 = sphi 0, %s269
    %s271 = sphi 0, %s269
    %s272 = sphi 0, %s271
    %s286 = sphi 0, %s272
  $region4: #{transformer_encoder_pallas.1} parent=0 // loop_header_branch
    %19 = sbr.rel (%p17) target = $region8
  $region5: #{transformer_encoder_pallas.1} parent=0 // loop_body
    %s21 = ssub.s32 %s16, 1
    %s22 = ssub.s32 %s16, 2
    %s23 = sadd.s32 %s16, 1
    %s25 = sadd.s32 %s24, 1
    %p28 = scmp.eq.s32.totalorder %s16, 1
    %p29 = scmp.ne.s32.totalorder %s24, %s26
    %p30 = scmp.eq.s32.totalorder %s16, 0
    %p31 = por %p29, %p30
    %p32 = scmp.ne.s32.totalorder %s24, %s26
    %p33 = scmp.eq.s32.totalorder %s21, 1
    %p34 = por %p32, %p33
    %p35 = scmp.ne.s32.totalorder %s26, %s27
    %p36 = scmp.eq.s32.totalorder %s21, 0
    %p37 = por %p35, %p36
    %p38 = scmp.ne.s32.totalorder %s26, %s27
    %p39 = scmp.eq.s32.totalorder %s22, 1
    %p40 = por %p38, %p39
    %p42 = scmp.ne.s32.totalorder %s27, %s41
    %p43 = scmp.eq.s32.totalorder %s22, 0
    %p44 = por %p42, %p43
    %s46 = sadd.s32 %s45, 1
    %p49 = scmp.eq.s32.totalorder %s16, 1
    %p50 = scmp.ne.s32.totalorder %s45, %s47
    %p51 = scmp.eq.s32.totalorder %s16, 0
    %p52 = por %p50, %p51
    %p53 = scmp.ne.s32.totalorder %s45, %s47
    %p54 = scmp.eq.s32.totalorder %s21, 1
    %p55 = por %p53, %p54
    %p56 = scmp.ne.s32.totalorder %s47, %s48
    %p57 = scmp.eq.s32.totalorder %s21, 0
    %p58 = por %p56, %p57
    %p59 = scmp.ne.s32.totalorder %s47, %s48
    %p60 = scmp.eq.s32.totalorder %s22, 1
    %p61 = por %p59, %p60
    %p63 = scmp.ne.s32.totalorder %s48, %s62
    %p64 = scmp.eq.s32.totalorder %s22, 0
    %p65 = por %p63, %p64
    %s66 = ssub.s32 %s16, %s23
    %p67 = scmp.eq.s32.totalorder %s66, 0
    %s69 = sadd.s32 %s68, 1
    %s70 = scalar_select %p67, %s68, %s69
    %p73 = pneg %p67
    %p74 = scmp.eq.s32.totalorder %s16, 1
    %p75 = por %p73, %p74
    %p76 = scmp.ne.s32.totalorder %s68, %s71
    %p77 = scmp.eq.s32.totalorder %s16, 0
    %p78 = por %p76, %p77
    %p79 = scmp.ne.s32.totalorder %s68, %s71
    %p80 = scmp.eq.s32.totalorder %s21, 1
    %p81 = por %p79, %p80
    %p82 = scmp.ne.s32.totalorder %s71, %s72
    %p83 = scmp.eq.s32.totalorder %s21, 0
    %p84 = por %p82, %p83
    %p85 = scmp.ne.s32.totalorder %s71, %s72
    %p86 = scmp.eq.s32.totalorder %s22, 1
    %p87 = por %p85, %p86
    %p89 = scmp.ne.s32.totalorder %s72, %s88
    %p90 = scmp.eq.s32.totalorder %s22, 0
    %p91 = por %p89, %p90
    %s92 = ssub.s32 %s16, %s23
    %p93 = scmp.eq.s32.totalorder %s92, 0
    %s95 = sadd.s32 %s94, 1
    %s96 = scalar_select %p93, %s94, %s95
    %p99 = pneg %p93
    %p100 = scmp.eq.s32.totalorder %s16, 1
    %p101 = por %p99, %p100
    %p102 = scmp.ne.s32.totalorder %s94, %s97
    %p103 = scmp.eq.s32.totalorder %s16, 0
    %p104 = por %p102, %p103
    %p105 = scmp.ne.s32.totalorder %s94, %s97
    %p106 = scmp.eq.s32.totalorder %s21, 1
    %p107 = por %p105, %p106
    %p108 = scmp.ne.s32.totalorder %s97, %s98
    %p109 = scmp.eq.s32.totalorder %s21, 0
    %p110 = por %p108, %p109
    %p111 = scmp.ne.s32.totalorder %s97, %s98
    %p112 = scmp.eq.s32.totalorder %s22, 1
    %p113 = por %p111, %p112
    %p115 = scmp.ne.s32.totalorder %s98, %s114
    %p116 = scmp.eq.s32.totalorder %s22, 0
    %p117 = por %p115, %p116
    %s118 = ssub.s32 %s16, %s23
    %p119 = scmp.eq.s32.totalorder %s118, 0
    %s121 = sadd.s32 %s120, 1
    %s122 = scalar_select %p119, %s120, %s121
    %p125 = pneg %p119
    %p126 = scmp.eq.s32.totalorder %s16, 1
    %p127 = por %p125, %p126
    %p128 = scmp.ne.s32.totalorder %s120, %s123
    %p129 = scmp.eq.s32.totalorder %s16, 0
    %p130 = por %p128, %p129
    %p131 = scmp.ne.s32.totalorder %s120, %s123
    %p132 = scmp.eq.s32.totalorder %s21, 1
    %p133 = por %p131, %p132
    %p134 = scmp.ne.s32.totalorder %s123, %s124
    %p135 = scmp.eq.s32.totalorder %s21, 0
    %p136 = por %p134, %p135
    %p137 = scmp.ne.s32.totalorder %s123, %s124
    %p138 = scmp.eq.s32.totalorder %s22, 1
    %p139 = por %p137, %p138
    %p141 = scmp.ne.s32.totalorder %s124, %s140
    %p142 = scmp.eq.s32.totalorder %s22, 0
    %p143 = por %p141, %p142
    %s144 = ssub.s32 %s16, %s23
    %p145 = scmp.eq.s32.totalorder %s144, 0
    %s147 = sadd.s32 %s146, 1
    %s148 = scalar_select %p145, %s146, %s147
    %p151 = pneg %p145
    %p152 = scmp.eq.s32.totalorder %s16, 1
    %p153 = por %p151, %p152
    %p154 = scmp.ne.s32.totalorder %s146, %s149
    %p155 = scmp.eq.s32.totalorder %s16, 0
    %p156 = por %p154, %p155
    %p157 = scmp.ne.s32.totalorder %s146, %s149
    %p158 = scmp.eq.s32.totalorder %s21, 1
    %p159 = por %p157, %p158
    %p160 = scmp.ne.s32.totalorder %s149, %s150
    %p161 = scmp.eq.s32.totalorder %s21, 0
    %p162 = por %p160, %p161
    %p163 = scmp.ne.s32.totalorder %s149, %s150
    %p164 = scmp.eq.s32.totalorder %s22, 1
    %p165 = por %p163, %p164
    %p167 = scmp.ne.s32.totalorder %s150, %s166
    %p168 = scmp.eq.s32.totalorder %s22, 0
    %p169 = por %p167, %p168
    %s170 = ssub.s32 %s16, %s23
    %p171 = scmp.eq.s32.totalorder %s170, 0
    %s173 = sadd.s32 %s172, 1
    %s174 = scalar_select %p171, %s172, %s173
    %p177 = pneg %p171
    %p178 = scmp.eq.s32.totalorder %s16, 1
    %p179 = por %p177, %p178
    %p180 = scmp.ne.s32.totalorder %s172, %s175
    %p181 = scmp.eq.s32.totalorder %s16, 0
    %p182 = por %p180, %p181
    %p183 = scmp.ne.s32.totalorder %s172, %s175
    %p184 = scmp.eq.s32.totalorder %s21, 1
    %p185 = por %p183, %p184
    %p186 = scmp.ne.s32.totalorder %s175, %s176
    %p187 = scmp.eq.s32.totalorder %s21, 0
    %p188 = por %p186, %p187
    %p189 = scmp.ne.s32.totalorder %s175, %s176
    %p190 = scmp.eq.s32.totalorder %s22, 1
    %p191 = por %p189, %p190
    %p193 = scmp.ne.s32.totalorder %s176, %s192
    %p194 = scmp.eq.s32.totalorder %s22, 0
    %p195 = por %p193, %p194
    %s196 = ssub.s32 %s16, %s23
    %p197 = scmp.eq.s32.totalorder %s196, 0
    %s199 = sadd.s32 %s198, 1
    %s200 = scalar_select %p197, %s198, %s199
    %p203 = pneg %p197
    %p204 = scmp.eq.s32.totalorder %s16, 1
    %p205 = por %p203, %p204
    %p206 = scmp.ne.s32.totalorder %s198, %s201
    %p207 = scmp.eq.s32.totalorder %s16, 0
    %p208 = por %p206, %p207
    %p209 = scmp.ne.s32.totalorder %s198, %s201
    %p210 = scmp.eq.s32.totalorder %s21, 1
    %p211 = por %p209, %p210
    %p212 = scmp.ne.s32.totalorder %s201, %s202
    %p213 = scmp.eq.s32.totalorder %s21, 0
    %p214 = por %p212, %p213
    %p215 = scmp.ne.s32.totalorder %s201, %s202
    %p216 = scmp.eq.s32.totalorder %s22, 1
    %p217 = por %p215, %p216
    %p219 = scmp.ne.s32.totalorder %s202, %s218
    %p220 = scmp.eq.s32.totalorder %s22, 0
    %p221 = por %p219, %p220
    %s222 = ssub.s32 %s16, %s23
    %p223 = scmp.eq.s32.totalorder %s222, 0
    %s225 = sadd.s32 %s224, 1
    %s226 = scalar_select %p223, %s224, %s225
    %p229 = pneg %p223
    %p230 = scmp.eq.s32.totalorder %s16, 1
    %p231 = por %p229, %p230
    %p232 = scmp.ne.s32.totalorder %s224, %s227
    %p233 = scmp.eq.s32.totalorder %s16, 0
    %p234 = por %p232, %p233
    %p235 = scmp.ne.s32.totalorder %s224, %s227
    %p236 = scmp.eq.s32.totalorder %s21, 1
    %p237 = por %p235, %p236
    %p238 = scmp.ne.s32.totalorder %s227, %s228
    %p239 = scmp.eq.s32.totalorder %s21, 0
    %p240 = por %p238, %p239
    %p241 = scmp.ne.s32.totalorder %s227, %s228
    %p242 = scmp.eq.s32.totalorder %s22, 1
    %p243 = por %p241, %p242
    %p245 = scmp.ne.s32.totalorder %s228, %s244
    %p246 = scmp.eq.s32.totalorder %s22, 0
    %p247 = por %p245, %p246
    %s249 = sadd.s32 %s248, 1
    %p252 = scmp.eq.s32.totalorder %s16, 1
    %p253 = scmp.ne.s32.totalorder %s248, %s250
    %p254 = scmp.eq.s32.totalorder %s16, 0
    %p255 = por %p253, %p254
    %p256 = scmp.ne.s32.totalorder %s248, %s250
    %p257 = scmp.eq.s32.totalorder %s21, 1
    %p258 = por %p256, %p257
    %p259 = scmp.ne.s32.totalorder %s250, %s251
    %p260 = scmp.eq.s32.totalorder %s21, 0
    %p261 = por %p259, %p260
    %p262 = scmp.ne.s32.totalorder %s250, %s251
    %p263 = scmp.eq.s32.totalorder %s22, 1
    %p264 = por %p262, %p263
    %p266 = scmp.ne.s32.totalorder %s251, %s265
    %p267 = scmp.eq.s32.totalorder %s22, 0
    %p268 = por %p266, %p267
    %s270 = sadd.s32 %s269, 1
    %p273 = scmp.eq.s32.totalorder %s16, 1
    %p274 = scmp.ne.s32.totalorder %s269, %s271
    %p275 = scmp.eq.s32.totalorder %s16, 0
    %p276 = por %p274, %p275
    %p277 = scmp.ne.s32.totalorder %s269, %s271
    %p278 = scmp.eq.s32.totalorder %s21, 1
    %p279 = por %p277, %p278
    %p280 = scmp.ne.s32.totalorder %s271, %s272
    %p281 = scmp.eq.s32.totalorder %s21, 0
    %p282 = por %p280, %p281
    %p283 = scmp.ne.s32.totalorder %s271, %s272
    %p284 = scmp.eq.s32.totalorder %s22, 1
    %p285 = por %p283, %p284
    %p287 = scmp.ne.s32.totalorder %s272, %s286
    %p288 = scmp.eq.s32.totalorder %s22, 0
    %p289 = por %p287, %p288
    %p290 = scmp.le.s32.totalorder 1, %s16
    %p291 = scmp.lt.s32.totalorder %s16, 3
    %p292 = pnand %p290, %p291
    %p293 = pneg %p292
    // Predicated region
    $region9: #{transformer_encoder_pallas.1} parent=5 // pred_check
      _
    $region10: #{transformer_encoder_pallas.1} parent=5 // pred_check_branch
      %295 = sbr.rel (%p292) target = $region12
    $region11: #{transformer_encoder_pallas.1} parent=5 // pred_region
      %s296 = ssub.s32 %s16, 1
      // Predicated region
      $region13: #{transformer_encoder_pallas.1} parent=11 // pred_check
        %p297 = pneg %p37
      $region14: #{transformer_encoder_pallas.1} parent=11 // pred_check_branch
        %299 = sbr.rel (%p297) target = $region16
      $region15: #{transformer_encoder_pallas.1} parent=11 // pred_region
        _
      $region16: #{transformer_encoder_pallas.1} parent=11 // pred_fallthru
        _
      // Predicated region
      $region17: #{transformer_encoder_pallas.1} parent=11 // pred_check
        %p300 = pneg %p58
      $region18: #{transformer_encoder_pallas.1} parent=11 // pred_check_branch
        %302 = sbr.rel (%p300) target = $region20
      $region19: #{transformer_encoder_pallas.1} parent=11 // pred_region
        _
      $region20: #{transformer_encoder_pallas.1} parent=11 // pred_fallthru
        _
      // Predicated region
      $region21: #{transformer_encoder_pallas.1} parent=11 // pred_check
        %p303 = pneg %p261
      $region22: #{transformer_encoder_pallas.1} parent=11 // pred_check_branch
        %305 = sbr.rel (%p303) target = $region24
      $region23: #{transformer_encoder_pallas.1} parent=11 // pred_region
        _
      $region24: #{transformer_encoder_pallas.1} parent=11 // pred_fallthru
        _
    $region12: #{transformer_encoder_pallas.1} parent=5 // pred_fallthru
      _
    %p306 = scmp.lt.s32.totalorder %s16, 2
    // Predicated region
    $region25: #{transformer_encoder_pallas.1} parent=5 // pred_check
      %p307 = pneg %p306
    $region26: #{transformer_encoder_pallas.1} parent=5 // pred_check_branch
      %309 = sbr.rel (%p307) target = $region28
    $region27: #{transformer_encoder_pallas.1} parent=5 // pred_region
      // Predicated region
      $region29: #{transformer_encoder_pallas.1} parent=27 // pred_check
        %p310 = pneg %p78
      $region30: #{transformer_encoder_pallas.1} parent=27 // pred_check_branch
        %312 = sbr.rel (%p310) target = $region32
      $region31: #{transformer_encoder_pallas.1} parent=27 // pred_region
        %p313 = scmp.lt.s32.totalorder %s16, 1
        %s314 = scalar_select %p313, %s16, 1
        %s315 = smul.addr %s314, 4
        %s316 = smul.addr %s315, 4
        %s317 = scalar_lea.vmem %s2, %s316
      $region32: #{transformer_encoder_pallas.1} parent=27 // pred_fallthru
        _
      // Predicated region
      $region33: #{transformer_encoder_pallas.1} parent=27 // pred_check
        %p318 = pneg %p104
      $region34: #{transformer_encoder_pallas.1} parent=27 // pred_check_branch
        %320 = sbr.rel (%p318) target = $region36
      $region35: #{transformer_encoder_pallas.1} parent=27 // pred_region
        %p321 = scmp.lt.s32.totalorder %s16, 1
        %s322 = scalar_select %p321, %s16, 1
        %s323 = scalar_lea.vmem %s3, %s322
      $region36: #{transformer_encoder_pallas.1} parent=27 // pred_fallthru
        _
      // Predicated region
      $region37: #{transformer_encoder_pallas.1} parent=27 // pred_check
        %p324 = pneg %p130
      $region38: #{transformer_encoder_pallas.1} parent=27 // pred_check_branch
        %326 = sbr.rel (%p324) target = $region40
      $region39: #{transformer_encoder_pallas.1} parent=27 // pred_region
        %p327 = scmp.lt.s32.totalorder %s16, 1
        %s328 = scalar_select %p327, %s16, 1
        %s329 = smul.addr %s328, 4
        %s330 = smul.addr %s329, 4
        %s331 = scalar_lea.vmem %s4, %s330
      $region40: #{transformer_encoder_pallas.1} parent=27 // pred_fallthru
        _
      // Predicated region
      $region41: #{transformer_encoder_pallas.1} parent=27 // pred_check
        %p332 = pneg %p156
      $region42: #{transformer_encoder_pallas.1} parent=27 // pred_check_branch
        %334 = sbr.rel (%p332) target = $region44
      $region43: #{transformer_encoder_pallas.1} parent=27 // pred_region
        %p335 = scmp.lt.s32.totalorder %s16, 1
        %s336 = scalar_select %p335, %s16, 1
        %s337 = smul.addr %s336, 4
        %s338 = smul.addr %s337, 4
        %s339 = scalar_lea.vmem %s5, %s338
      $region44: #{transformer_encoder_pallas.1} parent=27 // pred_fallthru
        _
      // Predicated region
      $region45: #{transformer_encoder_pallas.1} parent=27 // pred_check
        %p340 = pneg %p182
      $region46: #{transformer_encoder_pallas.1} parent=27 // pred_check_branch
        %342 = sbr.rel (%p340) target = $region48
      $region47: #{transformer_encoder_pallas.1} parent=27 // pred_region
        %p343 = scmp.lt.s32.totalorder %s16, 1
        %s344 = scalar_select %p343, %s16, 1
        %s345 = scalar_lea.vmem %s6, %s344
      $region48: #{transformer_encoder_pallas.1} parent=27 // pred_fallthru
        _
      // Predicated region
      $region49: #{transformer_encoder_pallas.1} parent=27 // pred_check
        %p346 = pneg %p208
      $region50: #{transformer_encoder_pallas.1} parent=27 // pred_check_branch
        %348 = sbr.rel (%p346) target = $region52
      $region51: #{transformer_encoder_pallas.1} parent=27 // pred_region
        %p349 = scmp.lt.s32.totalorder %s16, 1
        %s350 = scalar_select %p349, %s16, 1
        %s351 = smul.addr %s350, 8
        %s352 = smul.addr %s351, 4
        %s353 = scalar_lea.vmem %s7, %s352
      $region52: #{transformer_encoder_pallas.1} parent=27 // pred_fallthru
        _
      // Predicated region
      $region53: #{transformer_encoder_pallas.1} parent=27 // pred_check
        %p354 = pneg %p234
      $region54: #{transformer_encoder_pallas.1} parent=27 // pred_check_branch
        %356 = sbr.rel (%p354) target = $region56
      $region55: #{transformer_encoder_pallas.1} parent=27 // pred_region
        %p357 = scmp.lt.s32.totalorder %s16, 1
        %s358 = scalar_select %p357, %s16, 1
        %s359 = smul.addr %s358, 8
        %s360 = scalar_lea.vmem %s8, %s359
      $region56: #{transformer_encoder_pallas.1} parent=27 // pred_fallthru
        _
    $region28: #{transformer_encoder_pallas.1} parent=5 // pred_fallthru
      _
    %p361 = scmp.le.s32.totalorder 1, %s16
    %p362 = scmp.lt.s32.totalorder %s16, 3
    %p363 = pnand %p361, %p362
    %p364 = pneg %p363
    // Predicated region
    $region57: #{transformer_encoder_pallas.1} parent=5 // pred_check
      _
    $region58: #{transformer_encoder_pallas.1} parent=5 // pred_check_branch
      %366 = sbr.rel (%p363) target = $region60
    $region59: #{transformer_encoder_pallas.1} parent=5 // pred_region
      %s367 = ssub.s32 %s16, 1
      %p368 = pneg %p37
      %p369 = pneg %p34
      %p370 = pneg %p58
      %p371 = pneg %p55
      %p372 = scmp.lt.s32.totalorder %s21, 1
      %s373 = scalar_select %p372, %s21, 1
      %s374 = smul.addr %s373, 4
      %s375 = smul.addr %s374, 4
      %s376 = scalar_lea.vmem %s2, %s375
      %p377 = pneg %p84
      %p378 = pneg %p81
      %p379 = scmp.lt.s32.totalorder %s21, 1
      %s380 = scalar_select %p379, %s21, 1
      %s381 = scalar_lea.vmem %s3, %s380
      %p382 = pneg %p110
      %p383 = pneg %p107
      %p384 = scmp.lt.s32.totalorder %s21, 1
      %s385 = scalar_select %p384, %s21, 1
      %s386 = smul.addr %s385, 4
      %s387 = smul.addr %s386, 4
      %s388 = scalar_lea.vmem %s4, %s387
      %p389 = pneg %p136
      %p390 = pneg %p133
      %p391 = scmp.lt.s32.totalorder %s21, 1
      %s392 = scalar_select %p391, %s21, 1
      %s393 = smul.addr %s392, 4
      %s394 = smul.addr %s393, 4
      %s395 = scalar_lea.vmem %s5, %s394
      %p396 = pneg %p162
      %p397 = pneg %p159
      %p398 = scmp.lt.s32.totalorder %s21, 1
      %s399 = scalar_select %p398, %s21, 1
      %s400 = scalar_lea.vmem %s6, %s399
      %p401 = pneg %p188
      %p402 = pneg %p185
      %p403 = scmp.lt.s32.totalorder %s21, 1
      %s404 = scalar_select %p403, %s21, 1
      %s405 = smul.addr %s404, 8
      %s406 = smul.addr %s405, 4
      %s407 = scalar_lea.vmem %s7, %s406
      %p408 = pneg %p214
      %p409 = pneg %p211
      %p410 = scmp.lt.s32.totalorder %s21, 1
      %s411 = scalar_select %p410, %s21, 1
      %s412 = smul.addr %s411, 8
      %s413 = scalar_lea.vmem %s8, %s412
      %p414 = pneg %p240
      %p415 = pneg %p237
      %p416 = pneg %p261
      %p417 = pneg %p258
      %p418 = pneg %p282
      %p419 = pneg %p279
      %p420 = scmp.lt.s32.totalorder %s21, 1
      %s421 = scalar_select %p420, %s21, 1
      %s422 = smul.addr %s421, 4
      %s423 = smul.addr %s422, 4
      %s424 = scalar_lea.vmem %s2, %s423
      %p425 = scmp.lt.s32.totalorder %s21, 1
      %s426 = scalar_select %p425, %s21, 1
      %s427 = scalar_lea.vmem %s3, %s426
      %p428 = scmp.lt.s32.totalorder %s21, 1
      %s429 = scalar_select %p428, %s21, 1
      %s430 = smul.addr %s429, 4
      %s431 = smul.addr %s430, 4
      %s432 = scalar_lea.vmem %s4, %s431
      %p433 = scmp.lt.s32.totalorder %s21, 1
      %s434 = scalar_select %p433, %s21, 1
      %s435 = smul.addr %s434, 4
      %s436 = smul.addr %s435, 4
      %s437 = scalar_lea.vmem %s5, %s436
      %p438 = scmp.lt.s32.totalorder %s21, 1
      %s439 = scalar_select %p438, %s21, 1
      %s440 = scalar_lea.vmem %s6, %s439
      %p441 = scmp.lt.s32.totalorder %s21, 1
      %s442 = scalar_select %p441, %s21, 1
      %s443 = smul.addr %s442, 8
      %s444 = smul.addr %s443, 4
      %s445 = scalar_lea.vmem %s7, %s444
      %p446 = scmp.lt.s32.totalorder %s21, 1
      %s447 = scalar_select %p446, %s21, 1
      %s448 = smul.addr %s447, 8
      %s449 = scalar_lea.vmem %s8, %s448
      %p451 = scmp.eq.s32.totalorder %s21, 0
      // Predicated region
      $region61: #{transformer_encoder_pallas.1} parent=59 // pred_check
        %p452 = pneg %p451
      $region62: #{transformer_encoder_pallas.1} parent=59 // pred_check_branch
        %454 = sbr.rel (%p452) target = $region64
      $region63: #{transformer_encoder_pallas.1} parent=59 // pred_region
        %v455 = vld [vmem:[%s0] sm:$0xff]
        %v456 = vld [vmem:[%s0 + $0x8] sm:$0xff]
        %vm457 = vcmask 261120
        %458 = vst.msk [vmem:[#allocation2] sm:$0xff] %vm457, %v455
        %459 = vst.msk [vmem:[#allocation2 + $0x8] sm:$0xff] %vm457, %v456
      $region64: #{transformer_encoder_pallas.1} parent=59 // pred_fallthru
        _
      %v460 = vld [vmem:[#allocation2] sm:$0xff]
      %v461 = vld [vmem:[#allocation2 + $0x8] sm:$0xff]
      %v462 = vld [vmem:[%s449] sm:$0x3f]
      %v463 = vpack.c.bf16 %v461, %v460
      %v464 = vld [vmem:[%s424] sm:$0xf]
      %v465 = vld [vmem:[%s424 + $0x4] sm:$0xf]
      %v466 = vld [vmem:[%s424 + $0x8] sm:$0xf]
      %v467 = vld [vmem:[%s424 + $0xc] sm:$0xf]
      %v468 = vld [vmem:[%s427] sm:$0x1]
      %v470 = vlaneseq
      %v471 = vshrl.u32 %v470, 7
      %v472 = vsub.s32 0, %v471
      %v473 = vrot.slane %v468, %v472
      %v479 = vunpack.c.l.b16 %v464
      %v480 = vunpack.c.l.b16 %v465
      %v481 = vunpack.c.l.b16 %v466
      %v482 = vunpack.c.l.b16 %v467
      %v483 = vpack.c.b16 %v480, %v479
      %v484 = vpack.c.b16 %v482, %v481
      %vm487 = vcmask 261120
      %v489 = vsel %vm487, %v463, 0
      %491 = vmatprep.subr.bf16.mxu0 0
      %492 = vmatpush1.bf16.msra.mxu0 0
      %493 = vmatprep.subr.bf16.mxu0 0
      %494 = vmatpush1.bf16.msra.mxu0 0
      %495 = vmatprep.subr.bf16.mxu0 0
      %496 = vmatpush1.bf16.msra.mxu0 0
      %497 = vmatprep.subr.bf16.mxu0 0
      %498 = vmatpush1.bf16.msra.mxu0 0
      %499 = vmatprep.subr.bf16.mxu0 0
      %500 = vmatpush1.bf16.msra.mxu0 0
      %501 = vmatprep.subr.bf16.mxu0 0
      %502 = vmatpush1.bf16.msra.mxu0 0
      %503 = vmatprep.subr.bf16.mxu0 0
      %504 = vmatpush1.bf16.msra.mxu0 %v484
      %505 = vmatprep.subr.bf16.mxu0 0
      %506 = vmatpush1.bf16.msra.mxu0 %v483
      %507 = vmatprep.subr.bf16.mxu0 0
      %508 = vmatpush2.bf16.msra.mxu0 0
      %509 = vmatprep.subr.bf16.mxu0 0
      %510 = vmatpush2.bf16.msra.mxu0 0
      %511 = vmatprep.subr.bf16.mxu0 0
      %512 = vmatpush2.bf16.msra.mxu0 0
      %513 = vmatprep.subr.bf16.mxu0 0
      %514 = vmatpush2.bf16.msra.mxu0 0
      %515 = vmatprep.subr.bf16.mxu0 0
      %516 = vmatpush2.bf16.msra.mxu0 0
      %517 = vmatprep.subr.bf16.mxu0 0
      %518 = vmatpush2.bf16.msra.mxu0 0
      %519 = vmatprep.subr.bf16.mxu0 0
      %520 = vmatpush2.bf16.msra.mxu0 0
      %521 = vmatprep.subr.bf16.mxu0 0
      %522 = vmatpush2.bf16.msra.mxu0 0
      %523 = vmatprep.mubr.bf16.mxu0 0
      %524 = vmatmul.mubr.bf16.gmra.mxu0 %v489
      %v525 = vpop.f32.mrf.mxu0
      %v526 = vadd.f32 %v473, %v525
      %v527 = vpop.f32.mrf.mxu0
      %v528 = vpop.f32.mrf.mxu0
      %v529 = vadd.f32 %v473, %v528
      %v530 = vpop.f32.mrf.mxu0
      %531 = vdwg.mxu0
      %534 = vrot.lane.b32.xlu0 %v526, 120
      %v535 = vpop.permute.xlu0 %534
      %536 = vrot.lane.b32.xlu0 %v529, 120
      %v537 = vpop.permute.xlu0 %536
      %540 = vrot.lane.b32.xlu0 %v526, 112
      %v541 = vpop.permute.xlu0 %540
      %542 = vrot.lane.b32.xlu0 %v529, 112
      %v543 = vpop.permute.xlu0 %542
      %546 = vrot.lane.b32.xlu0 %v526, 104
      %v547 = vpop.permute.xlu0 %546
      %548 = vrot.lane.b32.xlu0 %v529, 104
      %v549 = vpop.permute.xlu0 %548
      %v552 = vpack.c.bf16 %v526, %v526
      %v553 = vpack.c.bf16 %v529, %v529
      %v554 = vpack.c.bf16 %v535, %v535
      %v555 = vpack.c.bf16 %v537, %v537
      %v556 = vpack.c.bf16 %v541, %v541
      %v557 = vpack.c.bf16 %v543, %v543
      %v558 = vpack.c.bf16 %v547, %v547
      %v559 = vpack.c.bf16 %v549, %v549
      %561 = vrot.lane.b32.xlu0 %v552, 96
      %v562 = vpop.permute.xlu0 %561
      %vm563 = vcmask 64512
      %v565 = vsel %vm563, %v552, 0
      %v568 = vsel %vm563, %v562, 0
      %570 = vmatprep.subr.bf16.mxu0 0
      %571 = vmatpush1.bf16.xpose.msra.mxu0 0
      %572 = vmatprep.subr.bf16.mxu0 0
      %573 = vmatpush1.bf16.xpose.msra.mxu0 0
      %574 = vmatprep.subr.bf16.mxu0 0
      %575 = vmatpush1.bf16.xpose.msra.mxu0 0
      %576 = vmatprep.subr.bf16.mxu0 0
      %577 = vmatpush1.bf16.xpose.msra.mxu0 0
      %578 = vmatprep.subr.bf16.mxu0 0
      %579 = vmatpush1.bf16.xpose.msra.mxu0 0
      %580 = vmatprep.subr.bf16.mxu0 0
      %581 = vmatpush1.bf16.xpose.msra.mxu0 0
      %582 = vmatprep.subr.bf16.mxu0 0
      %583 = vmatpush1.bf16.xpose.msra.mxu0 0
      %584 = vmatprep.subr.bf16.mxu0 0
      %585 = vmatpush1.bf16.xpose.msra.mxu0 %v568
      %586 = vmatprep.subr.bf16.mxu0 0
      %587 = vmatpush2.bf16.xpose.msra.mxu0 0
      %588 = vmatprep.subr.bf16.mxu0 0
      %589 = vmatpush2.bf16.xpose.msra.mxu0 0
      %590 = vmatprep.subr.bf16.mxu0 0
      %591 = vmatpush2.bf16.xpose.msra.mxu0 0
      %592 = vmatprep.subr.bf16.mxu0 0
      %593 = vmatpush2.bf16.xpose.msra.mxu0 0
      %594 = vmatprep.subr.bf16.mxu0 0
      %595 = vmatpush2.bf16.xpose.msra.mxu0 0
      %596 = vmatprep.subr.bf16.mxu0 0
      %597 = vmatpush2.bf16.xpose.msra.mxu0 0
      %598 = vmatprep.subr.bf16.mxu0 0
      %599 = vmatpush2.bf16.xpose.msra.mxu0 0
      %600 = vmatprep.subr.bf16.mxu0 0
      %601 = vmatpush2.bf16.xpose.msra.mxu0 0
      %602 = vmatprep.mubr.bf16.mxu0 0
      %603 = vmatmul.mubr.bf16.gmra.mxu0 %v565
      %v604 = vpop.f32.mrf.mxu0
      %v605 = vadd.f32 0.0, %v604
      %v606 = vpop.f32.mrf.mxu0
      %v607 = vpop.f32.mrf.mxu0
      %v608 = vpop.f32.mrf.mxu0
      %609 = vdwg.mxu0
      %611 = vrot.lane.b32.xlu0 %v553, 96
      %v612 = vpop.permute.xlu0 %611
      %v614 = vsel %vm563, %v553, 0
      %v617 = vsel %vm563, %v612, 0
      %619 = vmatprep.subr.bf16.mxu0 0
      %620 = vmatpush1.bf16.xpose.msra.mxu0 0
      %621 = vmatprep.subr.bf16.mxu0 0
      %622 = vmatpush1.bf16.xpose.msra.mxu0 0
      %623 = vmatprep.subr.bf16.mxu0 0
      %624 = vmatpush1.bf16.xpose.msra.mxu0 0
      %625 = vmatprep.subr.bf16.mxu0 0
      %626 = vmatpush1.bf16.xpose.msra.mxu0 0
      %627 = vmatprep.subr.bf16.mxu0 0
      %628 = vmatpush1.bf16.xpose.msra.mxu0 0
      %629 = vmatprep.subr.bf16.mxu0 0
      %630 = vmatpush1.bf16.xpose.msra.mxu0 0
      %631 = vmatprep.subr.bf16.mxu0 0
      %632 = vmatpush1.bf16.xpose.msra.mxu0 0
      %633 = vmatprep.subr.bf16.mxu0 0
      %634 = vmatpush1.bf16.xpose.msra.mxu0 %v617
      %635 = vmatprep.subr.bf16.mxu0 0
      %636 = vmatpush2.bf16.xpose.msra.mxu0 0
      %637 = vmatprep.subr.bf16.mxu0 0
      %638 = vmatpush2.bf16.xpose.msra.mxu0 0
      %639 = vmatprep.subr.bf16.mxu0 0
      %640 = vmatpush2.bf16.xpose.msra.mxu0 0
      %641 = vmatprep.subr.bf16.mxu0 0
      %642 = vmatpush2.bf16.xpose.msra.mxu0 0
      %643 = vmatprep.subr.bf16.mxu0 0
      %644 = vmatpush2.bf16.xpose.msra.mxu0 0
      %645 = vmatprep.subr.bf16.mxu0 0
      %646 = vmatpush2.bf16.xpose.msra.mxu0 0
      %647 = vmatprep.subr.bf16.mxu0 0
      %648 = vmatpush2.bf16.xpose.msra.mxu0 0
      %649 = vmatprep.subr.bf16.mxu0 0
      %650 = vmatpush2.bf16.xpose.msra.mxu0 0
      %651 = vmatprep.mubr.bf16.mxu0 0
      %652 = vmatmul.mubr.bf16.gmra.mxu0 %v614
      %v653 = vpop.f32.mrf.mxu0
      %v654 = vadd.f32 0.0, %v653
      %v655 = vpop.f32.mrf.mxu0
      %v656 = vpop.f32.mrf.mxu0
      %v657 = vpop.f32.mrf.mxu0
      %658 = vdwg.mxu0
      %660 = vrot.lane.b32.xlu0 %v554, 96
      %v661 = vpop.permute.xlu0 %660
      %v663 = vsel %vm563, %v554, 0
      %v666 = vsel %vm563, %v661, 0
      %668 = vmatprep.subr.bf16.mxu0 0
      %669 = vmatpush1.bf16.xpose.msra.mxu0 0
      %670 = vmatprep.subr.bf16.mxu0 0
      %671 = vmatpush1.bf16.xpose.msra.mxu0 0
      %672 = vmatprep.subr.bf16.mxu0 0
      %673 = vmatpush1.bf16.xpose.msra.mxu0 0
      %674 = vmatprep.subr.bf16.mxu0 0
      %675 = vmatpush1.bf16.xpose.msra.mxu0 0
      %676 = vmatprep.subr.bf16.mxu0 0
      %677 = vmatpush1.bf16.xpose.msra.mxu0 0
      %678 = vmatprep.subr.bf16.mxu0 0
      %679 = vmatpush1.bf16.xpose.msra.mxu0 0
      %680 = vmatprep.subr.bf16.mxu0 0
      %681 = vmatpush1.bf16.xpose.msra.mxu0 0
      %682 = vmatprep.subr.bf16.mxu0 0
      %683 = vmatpush1.bf16.xpose.msra.mxu0 %v666
      %684 = vmatprep.subr.bf16.mxu0 0
      %685 = vmatpush2.bf16.xpose.msra.mxu0 0
      %686 = vmatprep.subr.bf16.mxu0 0
      %687 = vmatpush2.bf16.xpose.msra.mxu0 0
      %688 = vmatprep.subr.bf16.mxu0 0
      %689 = vmatpush2.bf16.xpose.msra.mxu0 0
      %690 = vmatprep.subr.bf16.mxu0 0
      %691 = vmatpush2.bf16.xpose.msra.mxu0 0
      %692 = vmatprep.subr.bf16.mxu0 0
      %693 = vmatpush2.bf16.xpose.msra.mxu0 0
      %694 = vmatprep.subr.bf16.mxu0 0
      %695 = vmatpush2.bf16.xpose.msra.mxu0 0
      %696 = vmatprep.subr.bf16.mxu0 0
      %697 = vmatpush2.bf16.xpose.msra.mxu0 0
      %698 = vmatprep.subr.bf16.mxu0 0
      %699 = vmatpush2.bf16.xpose.msra.mxu0 0
      %700 = vmatprep.mubr.bf16.mxu0 0
      %701 = vmatmul.mubr.bf16.gmra.mxu0 %v663
      %v702 = vpop.f32.mrf.mxu0
      %v703 = vadd.f32 0.0, %v702
      %v704 = vpop.f32.mrf.mxu0
      %v705 = vpop.f32.mrf.mxu0
      %v706 = vpop.f32.mrf.mxu0
      %707 = vdwg.mxu0
      %709 = vrot.lane.b32.xlu0 %v555, 96
      %v710 = vpop.permute.xlu0 %709
      %v712 = vsel %vm563, %v555, 0
      %v715 = vsel %vm563, %v710, 0
      %717 = vmatprep.subr.bf16.mxu0 0
      %718 = vmatpush1.bf16.xpose.msra.mxu0 0
      %719 = vmatprep.subr.bf16.mxu0 0
      %720 = vmatpush1.bf16.xpose.msra.mxu0 0
      %721 = vmatprep.subr.bf16.mxu0 0
      %722 = vmatpush1.bf16.xpose.msra.mxu0 0
      %723 = vmatprep.subr.bf16.mxu0 0
      %724 = vmatpush1.bf16.xpose.msra.mxu0 0
      %725 = vmatprep.subr.bf16.mxu0 0
      %726 = vmatpush1.bf16.xpose.msra.mxu0 0
      %727 = vmatprep.subr.bf16.mxu0 0
      %728 = vmatpush1.bf16.xpose.msra.mxu0 0
      %729 = vmatprep.subr.bf16.mxu0 0
      %730 = vmatpush1.bf16.xpose.msra.mxu0 0
      %731 = vmatprep.subr.bf16.mxu0 0
      %732 = vmatpush1.bf16.xpose.msra.mxu0 %v715
      %733 = vmatprep.subr.bf16.mxu0 0
      %734 = vmatpush2.bf16.xpose.msra.mxu0 0
      %735 = vmatprep.subr.bf16.mxu0 0
      %736 = vmatpush2.bf16.xpose.msra.mxu0 0
      %737 = vmatprep.subr.bf16.mxu0 0
      %738 = vmatpush2.bf16.xpose.msra.mxu0 0
      %739 = vmatprep.subr.bf16.mxu0 0
      %740 = vmatpush2.bf16.xpose.msra.mxu0 0
      %741 = vmatprep.subr.bf16.mxu0 0
      %742 = vmatpush2.bf16.xpose.msra.mxu0 0
      %743 = vmatprep.subr.bf16.mxu0 0
      %744 = vmatpush2.bf16.xpose.msra.mxu0 0
      %745 = vmatprep.subr.bf16.mxu0 0
      %746 = vmatpush2.bf16.xpose.msra.mxu0 0
      %747 = vmatprep.subr.bf16.mxu0 0
      %748 = vmatpush2.bf16.xpose.msra.mxu0 0
      %749 = vmatprep.mubr.bf16.mxu0 0
      %750 = vmatmul.mubr.bf16.gmra.mxu0 %v712
      %v751 = vpop.f32.mrf.mxu0
      %v752 = vadd.f32 0.0, %v751
      %v753 = vpop.f32.mrf.mxu0
      %v754 = vpop.f32.mrf.mxu0
      %v755 = vpop.f32.mrf.mxu0
      %756 = vdwg.mxu0
      %758 = vrot.lane.b32.xlu0 %v556, 96
      %v759 = vpop.permute.xlu0 %758
      %v761 = vsel %vm563, %v556, 0
      %v764 = vsel %vm563, %v759, 0
      %766 = vmatprep.subr.bf16.mxu0 0
      %767 = vmatpush1.bf16.xpose.msra.mxu0 0
      %768 = vmatprep.subr.bf16.mxu0 0
      %769 = vmatpush1.bf16.xpose.msra.mxu0 0
      %770 = vmatprep.subr.bf16.mxu0 0
      %771 = vmatpush1.bf16.xpose.msra.mxu0 0
      %772 = vmatprep.subr.bf16.mxu0 0
      %773 = vmatpush1.bf16.xpose.msra.mxu0 0
      %774 = vmatprep.subr.bf16.mxu0 0
      %775 = vmatpush1.bf16.xpose.msra.mxu0 0
      %776 = vmatprep.subr.bf16.mxu0 0
      %777 = vmatpush1.bf16.xpose.msra.mxu0 0
      %778 = vmatprep.subr.bf16.mxu0 0
      %779 = vmatpush1.bf16.xpose.msra.mxu0 0
      %780 = vmatprep.subr.bf16.mxu0 0
      %781 = vmatpush1.bf16.xpose.msra.mxu0 %v764
      %782 = vmatprep.subr.bf16.mxu0 0
      %783 = vmatpush2.bf16.xpose.msra.mxu0 0
      %784 = vmatprep.subr.bf16.mxu0 0
      %785 = vmatpush2.bf16.xpose.msra.mxu0 0
      %786 = vmatprep.subr.bf16.mxu0 0
      %787 = vmatpush2.bf16.xpose.msra.mxu0 0
      %788 = vmatprep.subr.bf16.mxu0 0
      %789 = vmatpush2.bf16.xpose.msra.mxu0 0
      %790 = vmatprep.subr.bf16.mxu0 0
      %791 = vmatpush2.bf16.xpose.msra.mxu0 0
      %792 = vmatprep.subr.bf16.mxu0 0
      %793 = vmatpush2.bf16.xpose.msra.mxu0 0
      %794 = vmatprep.subr.bf16.mxu0 0
      %795 = vmatpush2.bf16.xpose.msra.mxu0 0
      %796 = vmatprep.subr.bf16.mxu0 0
      %797 = vmatpush2.bf16.xpose.msra.mxu0 0
      %798 = vmatprep.mubr.bf16.mxu0 0
      %799 = vmatmul.mubr.bf16.gmra.mxu0 %v761
      %v800 = vpop.f32.mrf.mxu0
      %v801 = vadd.f32 0.0, %v800
      %v802 = vpop.f32.mrf.mxu0
      %v803 = vpop.f32.mrf.mxu0
      %v804 = vpop.f32.mrf.mxu0
      %805 = vdwg.mxu0
      %807 = vrot.lane.b32.xlu0 %v557, 96
      %v808 = vpop.permute.xlu0 %807
      %v810 = vsel %vm563, %v557, 0
      %v813 = vsel %vm563, %v808, 0
      %815 = vmatprep.subr.bf16.mxu0 0
      %816 = vmatpush1.bf16.xpose.msra.mxu0 0
      %817 = vmatprep.subr.bf16.mxu0 0
      %818 = vmatpush1.bf16.xpose.msra.mxu0 0
      %819 = vmatprep.subr.bf16.mxu0 0
      %820 = vmatpush1.bf16.xpose.msra.mxu0 0
      %821 = vmatprep.subr.bf16.mxu0 0
      %822 = vmatpush1.bf16.xpose.msra.mxu0 0
      %823 = vmatprep.subr.bf16.mxu0 0
      %824 = vmatpush1.bf16.xpose.msra.mxu0 0
      %825 = vmatprep.subr.bf16.mxu0 0
      %826 = vmatpush1.bf16.xpose.msra.mxu0 0
      %827 = vmatprep.subr.bf16.mxu0 0
      %828 = vmatpush1.bf16.xpose.msra.mxu0 0
      %829 = vmatprep.subr.bf16.mxu0 0
      %830 = vmatpush1.bf16.xpose.msra.mxu0 %v813
      %831 = vmatprep.subr.bf16.mxu0 0
      %832 = vmatpush2.bf16.xpose.msra.mxu0 0
      %833 = vmatprep.subr.bf16.mxu0 0
      %834 = vmatpush2.bf16.xpose.msra.mxu0 0
      %835 = vmatprep.subr.bf16.mxu0 0
      %836 = vmatpush2.bf16.xpose.msra.mxu0 0
      %837 = vmatprep.subr.bf16.mxu0 0
      %838 = vmatpush2.bf16.xpose.msra.mxu0 0
      %839 = vmatprep.subr.bf16.mxu0 0
      %840 = vmatpush2.bf16.xpose.msra.mxu0 0
      %841 = vmatprep.subr.bf16.mxu0 0
      %842 = vmatpush2.bf16.xpose.msra.mxu0 0
      %843 = vmatprep.subr.bf16.mxu0 0
      %844 = vmatpush2.bf16.xpose.msra.mxu0 0
      %845 = vmatprep.subr.bf16.mxu0 0
      %846 = vmatpush2.bf16.xpose.msra.mxu0 0
      %847 = vmatprep.mubr.bf16.mxu0 0
      %848 = vmatmul.mubr.bf16.gmra.mxu0 %v810
      %v849 = vpop.f32.mrf.mxu0
      %v850 = vadd.f32 0.0, %v849
      %v851 = vpop.f32.mrf.mxu0
      %v852 = vpop.f32.mrf.mxu0
      %v853 = vpop.f32.mrf.mxu0
      %854 = vdwg.mxu0
      %856 = vrot.lane.b32.xlu0 %v558, 96
      %v857 = vpop.permute.xlu0 %856
      %v859 = vsel %vm563, %v558, 0
      %v862 = vsel %vm563, %v857, 0
      %864 = vmatprep.subr.bf16.mxu0 0
      %865 = vmatpush1.bf16.xpose.msra.mxu0 0
      %866 = vmatprep.subr.bf16.mxu0 0
      %867 = vmatpush1.bf16.xpose.msra.mxu0 0
      %868 = vmatprep.subr.bf16.mxu0 0
      %869 = vmatpush1.bf16.xpose.msra.mxu0 0
      %870 = vmatprep.subr.bf16.mxu0 0
      %871 = vmatpush1.bf16.xpose.msra.mxu0 0
      %872 = vmatprep.subr.bf16.mxu0 0
      %873 = vmatpush1.bf16.xpose.msra.mxu0 0
      %874 = vmatprep.subr.bf16.mxu0 0
      %875 = vmatpush1.bf16.xpose.msra.mxu0 0
      %876 = vmatprep.subr.bf16.mxu0 0
      %877 = vmatpush1.bf16.xpose.msra.mxu0 0
      %878 = vmatprep.subr.bf16.mxu0 0
      %879 = vmatpush1.bf16.xpose.msra.mxu0 %v862
      %880 = vmatprep.subr.bf16.mxu0 0
      %881 = vmatpush2.bf16.xpose.msra.mxu0 0
      %882 = vmatprep.subr.bf16.mxu0 0
      %883 = vmatpush2.bf16.xpose.msra.mxu0 0
      %884 = vmatprep.subr.bf16.mxu0 0
      %885 = vmatpush2.bf16.xpose.msra.mxu0 0
      %886 = vmatprep.subr.bf16.mxu0 0
      %887 = vmatpush2.bf16.xpose.msra.mxu0 0
      %888 = vmatprep.subr.bf16.mxu0 0
      %889 = vmatpush2.bf16.xpose.msra.mxu0 0
      %890 = vmatprep.subr.bf16.mxu0 0
      %891 = vmatpush2.bf16.xpose.msra.mxu0 0
      %892 = vmatprep.subr.bf16.mxu0 0
      %893 = vmatpush2.bf16.xpose.msra.mxu0 0
      %894 = vmatprep.subr.bf16.mxu0 0
      %895 = vmatpush2.bf16.xpose.msra.mxu0 0
      %896 = vmatprep.mubr.bf16.mxu0 0
      %897 = vmatmul.mubr.bf16.gmra.mxu0 %v859
      %v898 = vpop.f32.mrf.mxu0
      %v899 = vadd.f32 0.0, %v898
      %v900 = vpop.f32.mrf.mxu0
      %v901 = vpop.f32.mrf.mxu0
      %v902 = vpop.f32.mrf.mxu0
      %903 = vdwg.mxu0
      %905 = vrot.lane.b32.xlu0 %v559, 96
      %v906 = vpop.permute.xlu0 %905
      %v908 = vsel %vm563, %v559, 0
      %v911 = vsel %vm563, %v906, 0
      %913 = vmatprep.subr.bf16.mxu0 0
      %914 = vmatpush1.bf16.xpose.msra.mxu0 0
      %915 = vmatprep.subr.bf16.mxu0 0
      %916 = vmatpush1.bf16.xpose.msra.mxu0 0
      %917 = vmatprep.subr.bf16.mxu0 0
      %918 = vmatpush1.bf16.xpose.msra.mxu0 0
      %919 = vmatprep.subr.bf16.mxu0 0
      %920 = vmatpush1.bf16.xpose.msra.mxu0 0
      %921 = vmatprep.subr.bf16.mxu0 0
      %922 = vmatpush1.bf16.xpose.msra.mxu0 0
      %923 = vmatprep.subr.bf16.mxu0 0
      %924 = vmatpush1.bf16.xpose.msra.mxu0 0
      %925 = vmatprep.subr.bf16.mxu0 0
      %926 = vmatpush1.bf16.xpose.msra.mxu0 0
      %927 = vmatprep.subr.bf16.mxu0 0
      %928 = vmatpush1.bf16.xpose.msra.mxu0 %v911
      %929 = vmatprep.subr.bf16.mxu0 0
      %930 = vmatpush2.bf16.xpose.msra.mxu0 0
      %931 = vmatprep.subr.bf16.mxu0 0
      %932 = vmatpush2.bf16.xpose.msra.mxu0 0
      %933 = vmatprep.subr.bf16.mxu0 0
      %934 = vmatpush2.bf16.xpose.msra.mxu0 0
      %935 = vmatprep.subr.bf16.mxu0 0
      %936 = vmatpush2.bf16.xpose.msra.mxu0 0
      %937 = vmatprep.subr.bf16.mxu0 0
      %938 = vmatpush2.bf16.xpose.msra.mxu0 0
      %939 = vmatprep.subr.bf16.mxu0 0
      %940 = vmatpush2.bf16.xpose.msra.mxu0 0
      %941 = vmatprep.subr.bf16.mxu0 0
      %942 = vmatpush2.bf16.xpose.msra.mxu0 0
      %943 = vmatprep.subr.bf16.mxu0 0
      %944 = vmatpush2.bf16.xpose.msra.mxu0 0
      %945 = vmatprep.mubr.bf16.mxu0 0
      %946 = vmatmul.mubr.bf16.gmra.mxu0 %v908
      %v947 = vpop.f32.mrf.mxu0
      %v948 = vadd.f32 0.0, %v947
      %v949 = vpop.f32.mrf.mxu0
      %v950 = vpop.f32.mrf.mxu0
      %v951 = vpop.f32.mrf.mxu0
      %952 = vdwg.mxu0
      %v953 = vmul.f32 %v605, 0.35355338
      %v954 = vmul.f32 %v654, 0.35355338
      %v955 = vmul.f32 %v703, 0.35355338
      %v956 = vmul.f32 %v752, 0.35355338
      %v957 = vmul.f32 %v801, 0.35355338
      %v958 = vmul.f32 %v850, 0.35355338
      %v959 = vmul.f32 %v899, 0.35355338
      %v960 = vmul.f32 %v948, 0.35355338
      %v961 = vld [vmem:[%s1] sm:$0x1]
      %v962 = vld [vmem:[%s1 + $0x1] sm:$0x1]
      %v963 = vld [vmem:[%s1 + $0x2] sm:$0x1]
      %v964 = vld [vmem:[%s1 + $0x3] sm:$0x1]
      %v965 = vld [vmem:[%s1 + $0x4] sm:$0x1]
      %v966 = vld [vmem:[%s1 + $0x5] sm:$0x1]
      %v967 = vld [vmem:[%s1 + $0x6] sm:$0x1]
      %v968 = vld [vmem:[%s1 + $0x7] sm:$0x1]
      %v977 = vlaneseq
      %v978 = vshrl.u32 %v977, 7
      %v979 = vsub.s32 0, %v978
      %v980 = vrot.slane %v961, %v979
      %v981 = vlaneseq
      %v982 = vshrl.u32 %v981, 7
      %v983 = vsub.s32 0, %v982
      %v984 = vrot.slane %v962, %v983
      %v985 = vlaneseq
      %v986 = vshrl.u32 %v985, 7
      %v987 = vsub.s32 0, %v986
      %v988 = vrot.slane %v963, %v987
      %v989 = vlaneseq
      %v990 = vshrl.u32 %v989, 7
      %v991 = vsub.s32 0, %v990
      %v992 = vrot.slane %v964, %v991
      %v993 = vlaneseq
      %v994 = vshrl.u32 %v993, 7
      %v995 = vsub.s32 0, %v994
      %v996 = vrot.slane %v965, %v995
      %v997 = vlaneseq
      %v998 = vshrl.u32 %v997, 7
      %v999 = vsub.s32 0, %v998
      %v1000 = vrot.slane %v966, %v999
      %v1001 = vlaneseq
      %v1002 = vshrl.u32 %v1001, 7
      %v1003 = vsub.s32 0, %v1002
      %v1004 = vrot.slane %v967, %v1003
      %v1005 = vlaneseq
      %v1006 = vshrl.u32 %v1005, 7
      %v1007 = vsub.s32 0, %v1006
      %v1008 = vrot.slane %v968, %v1007
      %v1017 = vadd.f32 %v953, %v980
      %v1018 = vadd.f32 %v954, %v984
      %v1019 = vadd.f32 %v955, %v988
      %v1020 = vadd.f32 %v956, %v992
      %v1021 = vadd.f32 %v957, %v996
      %v1022 = vadd.f32 %v958, %v1000
      %v1023 = vadd.f32 %v959, %v1004
      %v1024 = vadd.f32 %v960, %v1008
      %v1025 = vsel %vm563, %v1017, -inf
      %1026 = vmax.xlane.f32.xlu0 %v1025
      %v1027 = vpop.xlane.xlu0 %1026
      %v1028 = vsel %vm563, %v1018, -inf
      %1029 = vmax.xlane.f32.xlu0 %v1028
      %v1030 = vpop.xlane.xlu0 %1029
      %v1031 = vsel %vm563, %v1019, -inf
      %1032 = vmax.xlane.f32.xlu0 %v1031
      %v1033 = vpop.xlane.xlu0 %1032
      %v1034 = vsel %vm563, %v1020, -inf
      %1035 = vmax.xlane.f32.xlu0 %v1034
      %v1036 = vpop.xlane.xlu0 %1035
      %v1037 = vsel %vm563, %v1021, -inf
      %1038 = vmax.xlane.f32.xlu0 %v1037
      %v1039 = vpop.xlane.xlu0 %1038
      %v1040 = vsel %vm563, %v1022, -inf
      %1041 = vmax.xlane.f32.xlu0 %v1040
      %v1042 = vpop.xlane.xlu0 %1041
      %v1043 = vsel %vm563, %v1023, -inf
      %1044 = vmax.xlane.f32.xlu0 %v1043
      %v1045 = vpop.xlane.xlu0 %1044
      %v1046 = vsel %vm563, %v1024, -inf
      %1047 = vmax.xlane.f32.xlu0 %v1046
      %v1048 = vpop.xlane.xlu0 %1047
      %v1049 = vsub.f32 %v1017, %v1027
      %v1050 = vsub.f32 %v1018, %v1030
      %v1051 = vsub.f32 %v1019, %v1033
      %v1052 = vsub.f32 %v1020, %v1036
      %v1053 = vsub.f32 %v1021, %v1039
      %v1054 = vsub.f32 %v1022, %v1042
      %v1055 = vsub.f32 %v1023, %v1045
      %v1056 = vsub.f32 %v1024, %v1048
      %v1057 = vmul.f32 %v1049, 1.442695
      %v1058 = vpow.pop %v1057
      %v1059 = vmul.f32 %v1050, 1.442695
      %v1060 = vpow.pop %v1059
      %v1061 = vmul.f32 %v1051, 1.442695
      %v1062 = vpow.pop %v1061
      %v1063 = vmul.f32 %v1052, 1.442695
      %v1064 = vpow.pop %v1063
      %v1065 = vmul.f32 %v1053, 1.442695
      %v1066 = vpow.pop %v1065
      %v1067 = vmul.f32 %v1054, 1.442695
      %v1068 = vpow.pop %v1067
      %v1069 = vmul.f32 %v1055, 1.442695
      %v1070 = vpow.pop %v1069
      %v1071 = vmul.f32 %v1056, 1.442695
      %v1072 = vpow.pop %v1071
      %v1073 = vsel %vm563, %v1058, 0.0
      %1074 = vadd.xlane.f32.xlu0 %v1073
      %v1075 = vpop.xlane.xlu0 %1074
      %v1076 = vsel %vm563, %v1060, 0.0
      %1077 = vadd.xlane.f32.xlu0 %v1076
      %v1078 = vpop.xlane.xlu0 %1077
      %v1079 = vsel %vm563, %v1062, 0.0
      %1080 = vadd.xlane.f32.xlu0 %v1079
      %v1081 = vpop.xlane.xlu0 %1080
      %v1082 = vsel %vm563, %v1064, 0.0
      %1083 = vadd.xlane.f32.xlu0 %v1082
      %v1084 = vpop.xlane.xlu0 %1083
      %v1085 = vsel %vm563, %v1066, 0.0
      %1086 = vadd.xlane.f32.xlu0 %v1085
      %v1087 = vpop.xlane.xlu0 %1086
      %v1088 = vsel %vm563, %v1068, 0.0
      %1089 = vadd.xlane.f32.xlu0 %v1088
      %v1090 = vpop.xlane.xlu0 %1089
      %v1091 = vsel %vm563, %v1070, 0.0
      %1092 = vadd.xlane.f32.xlu0 %v1091
      %v1093 = vpop.xlane.xlu0 %1092
      %v1094 = vsel %vm563, %v1072, 0.0
      %1095 = vadd.xlane.f32.xlu0 %v1094
      %v1096 = vpop.xlane.xlu0 %1095
      %v1097 = vrcp.pop %v1075
      %v1098 = vrcp.pop %v1078
      %v1099 = vrcp.pop %v1081
      %v1100 = vrcp.pop %v1084
      %v1101 = vrcp.pop %v1087
      %v1102 = vrcp.pop %v1090
      %v1103 = vrcp.pop %v1093
      %v1104 = vrcp.pop %v1096
      %v1105 = vmul.f32 %v1058, %v1097
      %v1106 = vmul.f32 %v1060, %v1098
      %v1107 = vmul.f32 %v1062, %v1099
      %v1108 = vmul.f32 %v1064, %v1100
      %v1109 = vmul.f32 %v1066, %v1101
      %v1110 = vmul.f32 %v1068, %v1102
      %v1111 = vmul.f32 %v1070, %v1103
      %v1112 = vmul.f32 %v1072, %v1104
      %v1113 = vpack.c.bf16 %v1105, %v1105
      %v1114 = vpack.c.bf16 %v1106, %v1106
      %v1115 = vpack.c.bf16 %v1107, %v1107
      %v1116 = vpack.c.bf16 %v1108, %v1108
      %v1117 = vpack.c.bf16 %v1109, %v1109
      %v1118 = vpack.c.bf16 %v1110, %v1110
      %v1119 = vpack.c.bf16 %v1111, %v1111
      %v1120 = vpack.c.bf16 %v1112, %v1112
      %1121 = vrot.lane.b32.xlu0 %v552, 64
      %v1122 = vpop.permute.xlu0 %1121
      %v1124 = vsel %vm563, %v1113, 0
      %vm1126 = vcmask 1043456
      %v1128 = vsel %vm1126, %v1122, 0
      %1130 = vmatprep.subr.bf16.mxu0 0
      %1131 = vmatpush1.bf16.msra.mxu0 0
      %1132 = vmatprep.subr.bf16.mxu0 0
      %1133 = vmatpush1.bf16.msra.mxu0 0
      %1134 = vmatprep.subr.bf16.mxu0 0
      %1135 = vmatpush1.bf16.msra.mxu0 0
      %1136 = vmatprep.subr.bf16.mxu0 0
      %1137 = vmatpush1.bf16.msra.mxu0 0
      %1138 = vmatprep.subr.bf16.mxu0 0
      %1139 = vmatpush1.bf16.msra.mxu0 0
      %1140 = vmatprep.subr.bf16.mxu0 0
      %1141 = vmatpush1.bf16.msra.mxu0 0
      %1142 = vmatprep.subr.bf16.mxu0 0
      %1143 = vmatpush1.bf16.msra.mxu0 0
      %1144 = vmatprep.subr.bf16.mxu0 0
      %1145 = vmatpush1.bf16.msra.mxu0 %v1128
      %1146 = vmatprep.subr.bf16.mxu0 0
      %1147 = vmatpush2.bf16.msra.mxu0 0
      %1148 = vmatprep.subr.bf16.mxu0 0
      %1149 = vmatpush2.bf16.msra.mxu0 0
      %1150 = vmatprep.subr.bf16.mxu0 0
      %1151 = vmatpush2.bf16.msra.mxu0 0
      %1152 = vmatprep.subr.bf16.mxu0 0
      %1153 = vmatpush2.bf16.msra.mxu0 0
      %1154 = vmatprep.subr.bf16.mxu0 0
      %1155 = vmatpush2.bf16.msra.mxu0 0
      %1156 = vmatprep.subr.bf16.mxu0 0
      %1157 = vmatpush2.bf16.msra.mxu0 0
      %1158 = vmatprep.subr.bf16.mxu0 0
      %1159 = vmatpush2.bf16.msra.mxu0 0
      %1160 = vmatprep.subr.bf16.mxu0 0
      %1161 = vmatpush2.bf16.msra.mxu0 0
      %1162 = vmatprep.mubr.bf16.mxu0 0
      %1163 = vmatmul.mubr.bf16.gmra.mxu0 %v1124
      %v1164 = vpop.f32.mrf.mxu0
      %v1165 = vadd.f32 0.0, %v1164
      %v1166 = vpop.f32.mrf.mxu0
      %v1167 = vpop.f32.mrf.mxu0
      %v1168 = vpop.f32.mrf.mxu0
      %1169 = vdwg.mxu0
      %1170 = vrot.lane.b32.xlu0 %v553, 64
      %v1171 = vpop.permute.xlu0 %1170
      %v1173 = vsel %vm563, %v1114, 0
      %v1176 = vsel %vm1126, %v1171, 0
      %1178 = vmatprep.subr.bf16.mxu0 0
      %1179 = vmatpush1.bf16.msra.mxu0 0
      %1180 = vmatprep.subr.bf16.mxu0 0
      %1181 = vmatpush1.bf16.msra.mxu0 0
      %1182 = vmatprep.subr.bf16.mxu0 0
      %1183 = vmatpush1.bf16.msra.mxu0 0
      %1184 = vmatprep.subr.bf16.mxu0 0
      %1185 = vmatpush1.bf16.msra.mxu0 0
      %1186 = vmatprep.subr.bf16.mxu0 0
      %1187 = vmatpush1.bf16.msra.mxu0 0
      %1188 = vmatprep.subr.bf16.mxu0 0
      %1189 = vmatpush1.bf16.msra.mxu0 0
      %1190 = vmatprep.subr.bf16.mxu0 0
      %1191 = vmatpush1.bf16.msra.mxu0 0
      %1192 = vmatprep.subr.bf16.mxu0 0
      %1193 = vmatpush1.bf16.msra.mxu0 %v1176
      %1194 = vmatprep.subr.bf16.mxu0 0
      %1195 = vmatpush2.bf16.msra.mxu0 0
      %1196 = vmatprep.subr.bf16.mxu0 0
      %1197 = vmatpush2.bf16.msra.mxu0 0
      %1198 = vmatprep.subr.bf16.mxu0 0
      %1199 = vmatpush2.bf16.msra.mxu0 0
      %1200 = vmatprep.subr.bf16.mxu0 0
      %1201 = vmatpush2.bf16.msra.mxu0 0
      %1202 = vmatprep.subr.bf16.mxu0 0
      %1203 = vmatpush2.bf16.msra.mxu0 0
      %1204 = vmatprep.subr.bf16.mxu0 0
      %1205 = vmatpush2.bf16.msra.mxu0 0
      %1206 = vmatprep.subr.bf16.mxu0 0
      %1207 = vmatpush2.bf16.msra.mxu0 0
      %1208 = vmatprep.subr.bf16.mxu0 0
      %1209 = vmatpush2.bf16.msra.mxu0 0
      %1210 = vmatprep.mubr.bf16.mxu0 0
      %1211 = vmatmul.mubr.bf16.gmra.mxu0 %v1173
      %v1212 = vpop.f32.mrf.mxu0
      %v1213 = vadd.f32 0.0, %v1212
      %v1214 = vpop.f32.mrf.mxu0
      %v1215 = vpop.f32.mrf.mxu0
      %v1216 = vpop.f32.mrf.mxu0
      %1217 = vdwg.mxu0
      %1218 = vrot.lane.b32.xlu0 %v554, 64
      %v1219 = vpop.permute.xlu0 %1218
      %v1221 = vsel %vm563, %v1115, 0
      %v1224 = vsel %vm1126, %v1219, 0
      %1226 = vmatprep.subr.bf16.mxu0 0
      %1227 = vmatpush1.bf16.msra.mxu0 0
      %1228 = vmatprep.subr.bf16.mxu0 0
      %1229 = vmatpush1.bf16.msra.mxu0 0
      %1230 = vmatprep.subr.bf16.mxu0 0
      %1231 = vmatpush1.bf16.msra.mxu0 0
      %1232 = vmatprep.subr.bf16.mxu0 0
      %1233 = vmatpush1.bf16.msra.mxu0 0
      %1234 = vmatprep.subr.bf16.mxu0 0
      %1235 = vmatpush1.bf16.msra.mxu0 0
      %1236 = vmatprep.subr.bf16.mxu0 0
      %1237 = vmatpush1.bf16.msra.mxu0 0
      %1238 = vmatprep.subr.bf16.mxu0 0
      %1239 = vmatpush1.bf16.msra.mxu0 0
      %1240 = vmatprep.subr.bf16.mxu0 0
      %1241 = vmatpush1.bf16.msra.mxu0 %v1224
      %1242 = vmatprep.subr.bf16.mxu0 0
      %1243 = vmatpush2.bf16.msra.mxu0 0
      %1244 = vmatprep.subr.bf16.mxu0 0
      %1245 = vmatpush2.bf16.msra.mxu0 0
      %1246 = vmatprep.subr.bf16.mxu0 0
      %1247 = vmatpush2.bf16.msra.mxu0 0
      %1248 = vmatprep.subr.bf16.mxu0 0
      %1249 = vmatpush2.bf16.msra.mxu0 0
      %1250 = vmatprep.subr.bf16.mxu0 0
      %1251 = vmatpush2.bf16.msra.mxu0 0
      %1252 = vmatprep.subr.bf16.mxu0 0
      %1253 = vmatpush2.bf16.msra.mxu0 0
      %1254 = vmatprep.subr.bf16.mxu0 0
      %1255 = vmatpush2.bf16.msra.mxu0 0
      %1256 = vmatprep.subr.bf16.mxu0 0
      %1257 = vmatpush2.bf16.msra.mxu0 0
      %1258 = vmatprep.mubr.bf16.mxu0 0
      %1259 = vmatmul.mubr.bf16.gmra.mxu0 %v1221
      %v1260 = vpop.f32.mrf.mxu0
      %v1261 = vadd.f32 0.0, %v1260
      %v1262 = vpop.f32.mrf.mxu0
      %v1263 = vpop.f32.mrf.mxu0
      %v1264 = vpop.f32.mrf.mxu0
      %1265 = vdwg.mxu0
      %1266 = vrot.lane.b32.xlu0 %v555, 64
      %v1267 = vpop.permute.xlu0 %1266
      %v1269 = vsel %vm563, %v1116, 0
      %v1272 = vsel %vm1126, %v1267, 0
      %1274 = vmatprep.subr.bf16.mxu0 0
      %1275 = vmatpush1.bf16.msra.mxu0 0
      %1276 = vmatprep.subr.bf16.mxu0 0
      %1277 = vmatpush1.bf16.msra.mxu0 0
      %1278 = vmatprep.subr.bf16.mxu0 0
      %1279 = vmatpush1.bf16.msra.mxu0 0
      %1280 = vmatprep.subr.bf16.mxu0 0
      %1281 = vmatpush1.bf16.msra.mxu0 0
      %1282 = vmatprep.subr.bf16.mxu0 0
      %1283 = vmatpush1.bf16.msra.mxu0 0
      %1284 = vmatprep.subr.bf16.mxu0 0
      %1285 = vmatpush1.bf16.msra.mxu0 0
      %1286 = vmatprep.subr.bf16.mxu0 0
      %1287 = vmatpush1.bf16.msra.mxu0 0
      %1288 = vmatprep.subr.bf16.mxu0 0
      %1289 = vmatpush1.bf16.msra.mxu0 %v1272
      %1290 = vmatprep.subr.bf16.mxu0 0
      %1291 = vmatpush2.bf16.msra.mxu0 0
      %1292 = vmatprep.subr.bf16.mxu0 0
      %1293 = vmatpush2.bf16.msra.mxu0 0
      %1294 = vmatprep.subr.bf16.mxu0 0
      %1295 = vmatpush2.bf16.msra.mxu0 0
      %1296 = vmatprep.subr.bf16.mxu0 0
      %1297 = vmatpush2.bf16.msra.mxu0 0
      %1298 = vmatprep.subr.bf16.mxu0 0
      %1299 = vmatpush2.bf16.msra.mxu0 0
      %1300 = vmatprep.subr.bf16.mxu0 0
      %1301 = vmatpush2.bf16.msra.mxu0 0
      %1302 = vmatprep.subr.bf16.mxu0 0
      %1303 = vmatpush2.bf16.msra.mxu0 0
      %1304 = vmatprep.subr.bf16.mxu0 0
      %1305 = vmatpush2.bf16.msra.mxu0 0
      %1306 = vmatprep.mubr.bf16.mxu0 0
      %1307 = vmatmul.mubr.bf16.gmra.mxu0 %v1269
      %v1308 = vpop.f32.mrf.mxu0
      %v1309 = vadd.f32 0.0, %v1308
      %v1310 = vpop.f32.mrf.mxu0
      %v1311 = vpop.f32.mrf.mxu0
      %v1312 = vpop.f32.mrf.mxu0
      %1313 = vdwg.mxu0
      %1314 = vrot.lane.b32.xlu0 %v556, 64
      %v1315 = vpop.permute.xlu0 %1314
      %v1317 = vsel %vm563, %v1117, 0
      %v1320 = vsel %vm1126, %v1315, 0
      %1322 = vmatprep.subr.bf16.mxu0 0
      %1323 = vmatpush1.bf16.msra.mxu0 0
      %1324 = vmatprep.subr.bf16.mxu0 0
      %1325 = vmatpush1.bf16.msra.mxu0 0
      %1326 = vmatprep.subr.bf16.mxu0 0
      %1327 = vmatpush1.bf16.msra.mxu0 0
      %1328 = vmatprep.subr.bf16.mxu0 0
      %1329 = vmatpush1.bf16.msra.mxu0 0
      %1330 = vmatprep.subr.bf16.mxu0 0
      %1331 = vmatpush1.bf16.msra.mxu0 0
      %1332 = vmatprep.subr.bf16.mxu0 0
      %1333 = vmatpush1.bf16.msra.mxu0 0
      %1334 = vmatprep.subr.bf16.mxu0 0
      %1335 = vmatpush1.bf16.msra.mxu0 0
      %1336 = vmatprep.subr.bf16.mxu0 0
      %1337 = vmatpush1.bf16.msra.mxu0 %v1320
      %1338 = vmatprep.subr.bf16.mxu0 0
      %1339 = vmatpush2.bf16.msra.mxu0 0
      %1340 = vmatprep.subr.bf16.mxu0 0
      %1341 = vmatpush2.bf16.msra.mxu0 0
      %1342 = vmatprep.subr.bf16.mxu0 0
      %1343 = vmatpush2.bf16.msra.mxu0 0
      %1344 = vmatprep.subr.bf16.mxu0 0
      %1345 = vmatpush2.bf16.msra.mxu0 0
      %1346 = vmatprep.subr.bf16.mxu0 0
      %1347 = vmatpush2.bf16.msra.mxu0 0
      %1348 = vmatprep.subr.bf16.mxu0 0
      %1349 = vmatpush2.bf16.msra.mxu0 0
      %1350 = vmatprep.subr.bf16.mxu0 0
      %1351 = vmatpush2.bf16.msra.mxu0 0
      %1352 = vmatprep.subr.bf16.mxu0 0
      %1353 = vmatpush2.bf16.msra.mxu0 0
      %1354 = vmatprep.mubr.bf16.mxu0 0
      %1355 = vmatmul.mubr.bf16.gmra.mxu0 %v1317
      %v1356 = vpop.f32.mrf.mxu0
      %v1357 = vadd.f32 0.0, %v1356
      %v1358 = vpop.f32.mrf.mxu0
      %v1359 = vpop.f32.mrf.mxu0
      %v1360 = vpop.f32.mrf.mxu0
      %1361 = vdwg.mxu0
      %1362 = vrot.lane.b32.xlu0 %v557, 64
      %v1363 = vpop.permute.xlu0 %1362
      %v1365 = vsel %vm563, %v1118, 0
      %v1368 = vsel %vm1126, %v1363, 0
      %1370 = vmatprep.subr.bf16.mxu0 0
      %1371 = vmatpush1.bf16.msra.mxu0 0
      %1372 = vmatprep.subr.bf16.mxu0 0
      %1373 = vmatpush1.bf16.msra.mxu0 0
      %1374 = vmatprep.subr.bf16.mxu0 0
      %1375 = vmatpush1.bf16.msra.mxu0 0
      %1376 = vmatprep.subr.bf16.mxu0 0
      %1377 = vmatpush1.bf16.msra.mxu0 0
      %1378 = vmatprep.subr.bf16.mxu0 0
      %1379 = vmatpush1.bf16.msra.mxu0 0
      %1380 = vmatprep.subr.bf16.mxu0 0
      %1381 = vmatpush1.bf16.msra.mxu0 0
      %1382 = vmatprep.subr.bf16.mxu0 0
      %1383 = vmatpush1.bf16.msra.mxu0 0
      %1384 = vmatprep.subr.bf16.mxu0 0
      %1385 = vmatpush1.bf16.msra.mxu0 %v1368
      %1386 = vmatprep.subr.bf16.mxu0 0
      %1387 = vmatpush2.bf16.msra.mxu0 0
      %1388 = vmatprep.subr.bf16.mxu0 0
      %1389 = vmatpush2.bf16.msra.mxu0 0
      %1390 = vmatprep.subr.bf16.mxu0 0
      %1391 = vmatpush2.bf16.msra.mxu0 0
      %1392 = vmatprep.subr.bf16.mxu0 0
      %1393 = vmatpush2.bf16.msra.mxu0 0
      %1394 = vmatprep.subr.bf16.mxu0 0
      %1395 = vmatpush2.bf16.msra.mxu0 0
      %1396 = vmatprep.subr.bf16.mxu0 0
      %1397 = vmatpush2.bf16.msra.mxu0 0
      %1398 = vmatprep.subr.bf16.mxu0 0
      %1399 = vmatpush2.bf16.msra.mxu0 0
      %1400 = vmatprep.subr.bf16.mxu0 0
      %1401 = vmatpush2.bf16.msra.mxu0 0
      %1402 = vmatprep.mubr.bf16.mxu0 0
      %1403 = vmatmul.mubr.bf16.gmra.mxu0 %v1365
      %v1404 = vpop.f32.mrf.mxu0
      %v1405 = vadd.f32 0.0, %v1404
      %v1406 = vpop.f32.mrf.mxu0
      %v1407 = vpop.f32.mrf.mxu0
      %v1408 = vpop.f32.mrf.mxu0
      %1409 = vdwg.mxu0
      %1410 = vrot.lane.b32.xlu0 %v558, 64
      %v1411 = vpop.permute.xlu0 %1410
      %v1413 = vsel %vm563, %v1119, 0
      %v1416 = vsel %vm1126, %v1411, 0
      %1418 = vmatprep.subr.bf16.mxu0 0
      %1419 = vmatpush1.bf16.msra.mxu0 0
      %1420 = vmatprep.subr.bf16.mxu0 0
      %1421 = vmatpush1.bf16.msra.mxu0 0
      %1422 = vmatprep.subr.bf16.mxu0 0
      %1423 = vmatpush1.bf16.msra.mxu0 0
      %1424 = vmatprep.subr.bf16.mxu0 0
      %1425 = vmatpush1.bf16.msra.mxu0 0
      %1426 = vmatprep.subr.bf16.mxu0 0
      %1427 = vmatpush1.bf16.msra.mxu0 0
      %1428 = vmatprep.subr.bf16.mxu0 0
      %1429 = vmatpush1.bf16.msra.mxu0 0
      %1430 = vmatprep.subr.bf16.mxu0 0
      %1431 = vmatpush1.bf16.msra.mxu0 0
      %1432 = vmatprep.subr.bf16.mxu0 0
      %1433 = vmatpush1.bf16.msra.mxu0 %v1416
      %1434 = vmatprep.subr.bf16.mxu0 0
      %1435 = vmatpush2.bf16.msra.mxu0 0
      %1436 = vmatprep.subr.bf16.mxu0 0
      %1437 = vmatpush2.bf16.msra.mxu0 0
      %1438 = vmatprep.subr.bf16.mxu0 0
      %1439 = vmatpush2.bf16.msra.mxu0 0
      %1440 = vmatprep.subr.bf16.mxu0 0
      %1441 = vmatpush2.bf16.msra.mxu0 0
      %1442 = vmatprep.subr.bf16.mxu0 0
      %1443 = vmatpush2.bf16.msra.mxu0 0
      %1444 = vmatprep.subr.bf16.mxu0 0
      %1445 = vmatpush2.bf16.msra.mxu0 0
      %1446 = vmatprep.subr.bf16.mxu0 0
      %1447 = vmatpush2.bf16.msra.mxu0 0
      %1448 = vmatprep.subr.bf16.mxu0 0
      %1449 = vmatpush2.bf16.msra.mxu0 0
      %1450 = vmatprep.mubr.bf16.mxu0 0
      %1451 = vmatmul.mubr.bf16.gmra.mxu0 %v1413
      %v1452 = vpop.f32.mrf.mxu0
      %v1453 = vadd.f32 0.0, %v1452
      %v1454 = vpop.f32.mrf.mxu0
      %v1455 = vpop.f32.mrf.mxu0
      %v1456 = vpop.f32.mrf.mxu0
      %1457 = vdwg.mxu0
      %1458 = vrot.lane.b32.xlu0 %v559, 64
      %v1459 = vpop.permute.xlu0 %1458
      %v1461 = vsel %vm563, %v1120, 0
      %v1464 = vsel %vm1126, %v1459, 0
      %1466 = vmatprep.subr.bf16.mxu0 0
      %1467 = vmatpush1.bf16.msra.mxu0 0
      %1468 = vmatprep.subr.bf16.mxu0 0
      %1469 = vmatpush1.bf16.msra.mxu0 0
      %1470 = vmatprep.subr.bf16.mxu0 0
      %1471 = vmatpush1.bf16.msra.mxu0 0
      %1472 = vmatprep.subr.bf16.mxu0 0
      %1473 = vmatpush1.bf16.msra.mxu0 0
      %1474 = vmatprep.subr.bf16.mxu0 0
      %1475 = vmatpush1.bf16.msra.mxu0 0
      %1476 = vmatprep.subr.bf16.mxu0 0
      %1477 = vmatpush1.bf16.msra.mxu0 0
      %1478 = vmatprep.subr.bf16.mxu0 0
      %1479 = vmatpush1.bf16.msra.mxu0 0
      %1480 = vmatprep.subr.bf16.mxu0 0
      %1481 = vmatpush1.bf16.msra.mxu0 %v1464
      %1482 = vmatprep.subr.bf16.mxu0 0
      %1483 = vmatpush2.bf16.msra.mxu0 0
      %1484 = vmatprep.subr.bf16.mxu0 0
      %1485 = vmatpush2.bf16.msra.mxu0 0
      %1486 = vmatprep.subr.bf16.mxu0 0
      %1487 = vmatpush2.bf16.msra.mxu0 0
      %1488 = vmatprep.subr.bf16.mxu0 0
      %1489 = vmatpush2.bf16.msra.mxu0 0
      %1490 = vmatprep.subr.bf16.mxu0 0
      %1491 = vmatpush2.bf16.msra.mxu0 0
      %1492 = vmatprep.subr.bf16.mxu0 0
      %1493 = vmatpush2.bf16.msra.mxu0 0
      %1494 = vmatprep.subr.bf16.mxu0 0
      %1495 = vmatpush2.bf16.msra.mxu0 0
      %1496 = vmatprep.subr.bf16.mxu0 0
      %1497 = vmatpush2.bf16.msra.mxu0 0
      %1498 = vmatprep.mubr.bf16.mxu0 0
      %1499 = vmatmul.mubr.bf16.gmra.mxu0 %v1461
      %v1500 = vpop.f32.mrf.mxu0
      %v1501 = vadd.f32 0.0, %v1500
      %v1502 = vpop.f32.mrf.mxu0
      %v1503 = vpop.f32.mrf.mxu0
      %v1504 = vpop.f32.mrf.mxu0
      %1505 = vdwg.mxu0
      %1508 = vrot.lane.b32.xlu0 %v1261, 8
      %v1509 = vpop.permute.xlu0 %1508
      %1510 = vrot.lane.b32.xlu0 %v1309, 8
      %v1511 = vpop.permute.xlu0 %1510
      %1516 = vrot.lane.b32.xlu0 %v1357, 16
      %v1517 = vpop.permute.xlu0 %1516
      %1518 = vrot.lane.b32.xlu0 %v1405, 16
      %v1519 = vpop.permute.xlu0 %1518
      %1524 = vrot.lane.b32.xlu0 %v1453, 24
      %v1525 = vpop.permute.xlu0 %1524
      %1526 = vrot.lane.b32.xlu0 %v1501, 24
      %v1527 = vpop.permute.xlu0 %1526
      %v1530 = vsel %vm563, %v1165, %v1509
      %v1531 = vsel %vm563, %v1213, %v1511
      %vm1532 = vcmask 130048
      %v1533 = vsel %vm1532, %v1530, %v1517
      %v1534 = vsel %vm1532, %v1531, %v1519
      %vm1535 = vcmask 195584
      %v1536 = vsel %vm1535, %v1533, %v1525
      %v1537 = vsel %vm1535, %v1534, %v1527
      %v1538 = vpack.c.bf16 %v1537, %v1536
      %v1539 = vld [vmem:[%s432] sm:$0xf]
      %v1540 = vld [vmem:[%s432 + $0x4] sm:$0xf]
      %v1541 = vld [vmem:[%s432 + $0x8] sm:$0xf]
      %v1542 = vld [vmem:[%s432 + $0xc] sm:$0xf]
      %v1543 = vlaneseq
      %v1544 = vshrl.u32 %v1543, 7
      %v1545 = vsub.s32 0, %v1544
      %v1546 = vrot.slane %v462, %v1545
      %v1551 = vunpack.c.l.b16 %v1539
      %v1552 = vunpack.c.l.b16 %v1540
      %v1553 = vunpack.c.l.b16 %v1541
      %v1554 = vunpack.c.l.b16 %v1542
      %v1555 = vpack.c.b16 %v1552, %v1551
      %v1556 = vpack.c.b16 %v1554, %v1553
      %v1560 = vsel %vm487, %v1538, 0
      %1562 = vmatprep.subr.bf16.mxu0 0
      %1563 = vmatpush1.bf16.msra.mxu0 0
      %1564 = vmatprep.subr.bf16.mxu0 0
      %1565 = vmatpush1.bf16.msra.mxu0 0
      %1566 = vmatprep.subr.bf16.mxu0 0
      %1567 = vmatpush1.bf16.msra.mxu0 0
      %1568 = vmatprep.subr.bf16.mxu0 0
      %1569 = vmatpush1.bf16.msra.mxu0 0
      %1570 = vmatprep.subr.bf16.mxu0 0
      %1571 = vmatpush1.bf16.msra.mxu0 0
      %1572 = vmatprep.subr.bf16.mxu0 0
      %1573 = vmatpush1.bf16.msra.mxu0 0
      %1574 = vmatprep.subr.bf16.mxu0 0
      %1575 = vmatpush1.bf16.msra.mxu0 %v1556
      %1576 = vmatprep.subr.bf16.mxu0 0
      %1577 = vmatpush1.bf16.msra.mxu0 %v1555
      %1578 = vmatprep.subr.bf16.mxu0 0
      %1579 = vmatpush2.bf16.msra.mxu0 0
      %1580 = vmatprep.subr.bf16.mxu0 0
      %1581 = vmatpush2.bf16.msra.mxu0 0
      %1582 = vmatprep.subr.bf16.mxu0 0
      %1583 = vmatpush2.bf16.msra.mxu0 0
      %1584 = vmatprep.subr.bf16.mxu0 0
      %1585 = vmatpush2.bf16.msra.mxu0 0
      %1586 = vmatprep.subr.bf16.mxu0 0
      %1587 = vmatpush2.bf16.msra.mxu0 0
      %1588 = vmatprep.subr.bf16.mxu0 0
      %1589 = vmatpush2.bf16.msra.mxu0 0
      %1590 = vmatprep.subr.bf16.mxu0 0
      %1591 = vmatpush2.bf16.msra.mxu0 0
      %1592 = vmatprep.subr.bf16.mxu0 0
      %1593 = vmatpush2.bf16.msra.mxu0 0
      %1594 = vmatprep.mubr.bf16.mxu0 0
      %1595 = vmatmul.mubr.bf16.gmra.mxu0 %v1560
      %v1596 = vpop.f32.mrf.mxu0
      %v1597 = vadd.f32 %v1546, %v1596
      %v1598 = vpop.f32.mrf.mxu0
      %v1599 = vpop.f32.mrf.mxu0
      %v1600 = vadd.f32 %v1546, %v1599
      %v1601 = vpop.f32.mrf.mxu0
      %1602 = vdwg.mxu0
      %v1603 = vadd.f32 %v460, %v1597
      %v1604 = vadd.f32 %v461, %v1600
      %v1605 = vsel %vm487, %v1603, 0.0
      %1606 = vadd.xlane.f32.xlu0 %v1605
      %v1607 = vpop.xlane.xlu0 %1606
      %v1608 = vsel %vm487, %v1604, 0.0
      %1609 = vadd.xlane.f32.xlu0 %v1608
      %v1610 = vpop.xlane.xlu0 %1609
      %v1611 = vrcp.pop 32.0
      %v1612 = vmul.f32 %v1607, %v1611
      %v1613 = vmul.f32 %v1610, %v1611
      %v1614 = vsub.f32 %v1603, %v1612
      %v1615 = vsub.f32 %v1604, %v1613
      %v1616 = vmul.f32 %v1614, %v1614
      %v1617 = vmul.f32 %v1615, %v1615
      %v1618 = vsel %vm487, %v1616, 0.0
      %1619 = vadd.xlane.f32.xlu0 %v1618
      %v1620 = vpop.xlane.xlu0 %1619
      %v1621 = vsel %vm487, %v1617, 0.0
      %1622 = vadd.xlane.f32.xlu0 %v1621
      %v1623 = vpop.xlane.xlu0 %1622
      %v1624 = vmul.f32 %v1620, %v1611
      %v1625 = vmul.f32 %v1623, %v1611
      %v1626 = vadd.f32 %v1624, 1e-05
      %v1627 = vadd.f32 %v1625, 1e-05
      %v1628 = vrsqrt.pop %v1626
      %v1629 = vrsqrt.pop %v1627
      %v1630 = vmul.f32 %v1614, %v1628
      %v1631 = vmul.f32 %v1615, %v1629
      %v1632 = vlaneseq
      %v1633 = vshrl.u32 %v1632, 7
      %v1634 = vsub.s32 1, %v1633
      %v1635 = vrot.slane %v462, %v1634
      %v1636 = vmul.f32 %v1630, %v1635
      %v1637 = vmul.f32 %v1631, %v1635
      %v1638 = vlaneseq
      %v1639 = vshrl.u32 %v1638, 7
      %v1640 = vsub.s32 2, %v1639
      %v1641 = vrot.slane %v462, %v1640
      %v1642 = vadd.f32 %v1636, %v1641
      %v1643 = vadd.f32 %v1637, %v1641
      %v1644 = vpack.c.bf16 %v1643, %v1642
      %v1645 = vld [vmem:[%s437] sm:$0xf]
      %v1646 = vld [vmem:[%s437 + $0x4] sm:$0xf]
      %v1647 = vld [vmem:[%s437 + $0x8] sm:$0xf]
      %v1648 = vld [vmem:[%s437 + $0xc] sm:$0xf]
      %v1649 = vld [vmem:[%s440] sm:$0x1]
      %v1651 = vlaneseq
      %v1652 = vshrl.u32 %v1651, 7
      %v1653 = vsub.s32 0, %v1652
      %v1654 = vrot.slane %v1649, %v1653
      %v1660 = vunpack.c.l.b16 %v1645
      %v1661 = vunpack.c.l.b16 %v1646
      %v1662 = vunpack.c.l.b16 %v1647
      %v1663 = vunpack.c.l.b16 %v1648
      %v1664 = vpack.c.b16 %v1661, %v1660
      %v1665 = vpack.c.b16 %v1663, %v1662
      %v1669 = vsel %vm487, %v1644, 0
      %1671 = vmatprep.subr.bf16.mxu0 0
      %1672 = vmatpush1.bf16.msra.mxu0 0
      %1673 = vmatprep.subr.bf16.mxu0 0
      %1674 = vmatpush1.bf16.msra.mxu0 0
      %1675 = vmatprep.subr.bf16.mxu0 0
      %1676 = vmatpush1.bf16.msra.mxu0 0
      %1677 = vmatprep.subr.bf16.mxu0 0
      %1678 = vmatpush1.bf16.msra.mxu0 0
      %1679 = vmatprep.subr.bf16.mxu0 0
      %1680 = vmatpush1.bf16.msra.mxu0 0
      %1681 = vmatprep.subr.bf16.mxu0 0
      %1682 = vmatpush1.bf16.msra.mxu0 0
      %1683 = vmatprep.subr.bf16.mxu0 0
      %1684 = vmatpush1.bf16.msra.mxu0 %v1665
      %1685 = vmatprep.subr.bf16.mxu0 0
      %1686 = vmatpush1.bf16.msra.mxu0 %v1664
      %1687 = vmatprep.subr.bf16.mxu0 0
      %1688 = vmatpush2.bf16.msra.mxu0 0
      %1689 = vmatprep.subr.bf16.mxu0 0
      %1690 = vmatpush2.bf16.msra.mxu0 0
      %1691 = vmatprep.subr.bf16.mxu0 0
      %1692 = vmatpush2.bf16.msra.mxu0 0
      %1693 = vmatprep.subr.bf16.mxu0 0
      %1694 = vmatpush2.bf16.msra.mxu0 0
      %1695 = vmatprep.subr.bf16.mxu0 0
      %1696 = vmatpush2.bf16.msra.mxu0 0
      %1697 = vmatprep.subr.bf16.mxu0 0
      %1698 = vmatpush2.bf16.msra.mxu0 0
      %1699 = vmatprep.subr.bf16.mxu0 0
      %1700 = vmatpush2.bf16.msra.mxu0 0
      %1701 = vmatprep.subr.bf16.mxu0 0
      %1702 = vmatpush2.bf16.msra.mxu0 0
      %1703 = vmatprep.mubr.bf16.mxu0 0
      %1704 = vmatmul.mubr.bf16.gmra.mxu0 %v1669
      %v1705 = vpop.f32.mrf.mxu0
      %v1706 = vadd.f32 %v1654, %v1705
      %v1707 = vpop.f32.mrf.mxu0
      %v1708 = vpop.f32.mrf.mxu0
      %v1709 = vadd.f32 %v1654, %v1708
      %v1710 = vpop.f32.mrf.mxu0
      %1711 = vdwg.mxu0
      %v1712 = vmax.f32 %v1706, 0.0
      %v1713 = vmax.f32 %v1709, 0.0
      %v1714 = vpack.c.bf16 %v1713, %v1712
      %v1715 = vld [vmem:[%s445] sm:$0xf]
      %v1716 = vld [vmem:[%s445 + $0x4] sm:$0xf]
      %v1717 = vld [vmem:[%s445 + $0x8] sm:$0xf]
      %v1718 = vld [vmem:[%s445 + $0xc] sm:$0xf]
      %v1719 = vld [vmem:[%s445 + $0x10] sm:$0xf]
      %v1720 = vld [vmem:[%s445 + $0x14] sm:$0xf]
      %v1721 = vld [vmem:[%s445 + $0x18] sm:$0xf]
      %v1722 = vld [vmem:[%s445 + $0x1c] sm:$0xf]
      %v1723 = vlaneseq
      %v1724 = vshrl.u32 %v1723, 7
      %v1725 = vsub.s32 3, %v1724
      %v1726 = vrot.slane %v462, %v1725
      %v1735 = vunpack.c.l.b16 %v1715
      %v1736 = vunpack.c.l.b16 %v1716
      %v1737 = vunpack.c.l.b16 %v1717
      %v1738 = vunpack.c.l.b16 %v1718
      %v1739 = vunpack.c.l.b16 %v1719
      %v1740 = vunpack.c.l.b16 %v1720
      %v1741 = vunpack.c.l.b16 %v1721
      %v1742 = vunpack.c.l.b16 %v1722
      %v1743 = vpack.c.b16 %v1736, %v1735
      %v1744 = vpack.c.b16 %v1738, %v1737
      %v1745 = vpack.c.b16 %v1740, %v1739
      %v1746 = vpack.c.b16 %v1742, %v1741
      %vm1751 = vcmask 523264
      %v1753 = vsel %vm1751, %v1714, 0
      %1755 = vmatprep.subr.bf16.mxu0 0
      %1756 = vmatpush1.bf16.msra.mxu0 0
      %1757 = vmatprep.subr.bf16.mxu0 0
      %1758 = vmatpush1.bf16.msra.mxu0 0
      %1759 = vmatprep.subr.bf16.mxu0 0
      %1760 = vmatpush1.bf16.msra.mxu0 0
      %1761 = vmatprep.subr.bf16.mxu0 0
      %1762 = vmatpush1.bf16.msra.mxu0 0
      %1763 = vmatprep.subr.bf16.mxu0 0
      %1764 = vmatpush1.bf16.msra.mxu0 %v1746
      %1765 = vmatprep.subr.bf16.mxu0 0
      %1766 = vmatpush1.bf16.msra.mxu0 %v1745
      %1767 = vmatprep.subr.bf16.mxu0 0
      %1768 = vmatpush1.bf16.msra.mxu0 %v1744
      %1769 = vmatprep.subr.bf16.mxu0 0
      %1770 = vmatpush1.bf16.msra.mxu0 %v1743
      %1771 = vmatprep.subr.bf16.mxu0 0
      %1772 = vmatpush2.bf16.msra.mxu0 0
      %1773 = vmatprep.subr.bf16.mxu0 0
      %1774 = vmatpush2.bf16.msra.mxu0 0
      %1775 = vmatprep.subr.bf16.mxu0 0
      %1776 = vmatpush2.bf16.msra.mxu0 0
      %1777 = vmatprep.subr.bf16.mxu0 0
      %1778 = vmatpush2.bf16.msra.mxu0 0
      %1779 = vmatprep.subr.bf16.mxu0 0
      %1780 = vmatpush2.bf16.msra.mxu0 0
      %1781 = vmatprep.subr.bf16.mxu0 0
      %1782 = vmatpush2.bf16.msra.mxu0 0
      %1783 = vmatprep.subr.bf16.mxu0 0
      %1784 = vmatpush2.bf16.msra.mxu0 0
      %1785 = vmatprep.subr.bf16.mxu0 0
      %1786 = vmatpush2.bf16.msra.mxu0 0
      %1787 = vmatprep.mubr.bf16.mxu0 0
      %1788 = vmatmul.mubr.bf16.gmra.mxu0 %v1753
      %v1789 = vpop.f32.mrf.mxu0
      %v1790 = vadd.f32 %v1726, %v1789
      %v1791 = vpop.f32.mrf.mxu0
      %v1792 = vpop.f32.mrf.mxu0
      %v1793 = vadd.f32 %v1726, %v1792
      %v1794 = vpop.f32.mrf.mxu0
      %1795 = vdwg.mxu0
      %v1796 = vadd.f32 %v1642, %v1790
      %v1797 = vadd.f32 %v1643, %v1793
      %v1798 = vsel %vm487, %v1796, 0.0
      %1799 = vadd.xlane.f32.xlu0 %v1798
      %v1800 = vpop.xlane.xlu0 %1799
      %v1801 = vsel %vm487, %v1797, 0.0
      %1802 = vadd.xlane.f32.xlu0 %v1801
      %v1803 = vpop.xlane.xlu0 %1802
      %v1804 = vmul.f32 %v1800, %v1611
      %v1805 = vmul.f32 %v1803, %v1611
      %v1806 = vsub.f32 %v1796, %v1804
      %v1807 = vsub.f32 %v1797, %v1805
      %v1808 = vmul.f32 %v1806, %v1806
      %v1809 = vmul.f32 %v1807, %v1807
      %v1810 = vsel %vm487, %v1808, 0.0
      %1811 = vadd.xlane.f32.xlu0 %v1810
      %v1812 = vpop.xlane.xlu0 %1811
      %v1813 = vsel %vm487, %v1809, 0.0
      %1814 = vadd.xlane.f32.xlu0 %v1813
      %v1815 = vpop.xlane.xlu0 %1814
      %v1816 = vmul.f32 %v1812, %v1611
      %v1817 = vmul.f32 %v1815, %v1611
      %v1818 = vadd.f32 %v1816, 1e-05
      %v1819 = vadd.f32 %v1817, 1e-05
      %v1820 = vrsqrt.pop %v1818
      %v1821 = vrsqrt.pop %v1819
      %v1822 = vmul.f32 %v1806, %v1820
      %v1823 = vmul.f32 %v1807, %v1821
      %v1824 = vlaneseq
      %v1825 = vshrl.u32 %v1824, 7
      %v1826 = vsub.s32 4, %v1825
      %v1827 = vrot.slane %v462, %v1826
      %v1828 = vmul.f32 %v1822, %v1827
      %v1829 = vmul.f32 %v1823, %v1827
      %v1830 = vlaneseq
      %v1831 = vshrl.u32 %v1830, 7
      %v1832 = vsub.s32 5, %v1831
      %v1833 = vrot.slane %v462, %v1832
      %v1834 = vadd.f32 %v1828, %v1833
      %v1835 = vadd.f32 %v1829, %v1833
      %1836 = vst.msk [vmem:[#allocation2] sm:$0xff] %vm487, %v1834
      %1837 = vst.msk [vmem:[#allocation2 + $0x8] sm:$0xff] %vm487, %v1835
      %v1838 = vld [vmem:[%s9] sm:$0x1]
      %v1839 = vld [vmem:[%s9 + $0x1] sm:$0x1]
      %v1840 = vsel %vm487, %v1834, 0.0
      %1841 = vadd.xlane.f32.xlu0 %v1840
      %v1842 = vpop.xlane.xlu0 %1841
      %v1843 = vsel %vm487, %v1835, 0.0
      %1844 = vadd.xlane.f32.xlu0 %v1843
      %v1845 = vpop.xlane.xlu0 %1844
      %v1846 = vmul.f32 %v1842, %v1611
      %v1847 = vmul.f32 %v1845, %v1611
      %v1848 = vsub.f32 %v1834, %v1846
      %v1849 = vsub.f32 %v1835, %v1847
      %v1850 = vmul.f32 %v1848, %v1848
      %v1851 = vmul.f32 %v1849, %v1849
      %v1852 = vsel %vm487, %v1850, 0.0
      %1853 = vadd.xlane.f32.xlu0 %v1852
      %v1854 = vpop.xlane.xlu0 %1853
      %v1855 = vsel %vm487, %v1851, 0.0
      %1856 = vadd.xlane.f32.xlu0 %v1855
      %v1857 = vpop.xlane.xlu0 %1856
      %v1858 = vmul.f32 %v1854, %v1611
      %v1859 = vmul.f32 %v1857, %v1611
      %v1860 = vadd.f32 %v1858, 1e-05
      %v1861 = vadd.f32 %v1859, 1e-05
      %v1862 = vrsqrt.pop %v1860
      %v1863 = vrsqrt.pop %v1861
      %v1864 = vmul.f32 %v1848, %v1862
      %v1865 = vmul.f32 %v1849, %v1863
      %v1866 = vlaneseq
      %v1867 = vshrl.u32 %v1866, 7
      %v1868 = vsub.s32 0, %v1867
      %v1869 = vrot.slane %v1838, %v1868
      %v1870 = vmul.f32 %v1864, %v1869
      %v1871 = vmul.f32 %v1865, %v1869
      %v1872 = vlaneseq
      %v1873 = vshrl.u32 %v1872, 7
      %v1874 = vsub.s32 0, %v1873
      %v1875 = vrot.slane %v1839, %v1874
      %v1876 = vadd.f32 %v1870, %v1875
      %v1877 = vadd.f32 %v1871, %v1875
      %1878 = vst.msk [vmem:[%s10] sm:$0xff] %vm487, %v1876
      %1879 = vst.msk [vmem:[%s10 + $0x8] sm:$0xff] %vm487, %v1877
      // Predicated region
      $region65: #{transformer_encoder_pallas.1} parent=59 // pred_check
        %p1880 = pneg %p279
      $region66: #{transformer_encoder_pallas.1} parent=59 // pred_check_branch
        %1882 = sbr.rel (%p1880) target = $region68
      $region67: #{transformer_encoder_pallas.1} parent=59 // pred_region
        _
      $region68: #{transformer_encoder_pallas.1} parent=59 // pred_fallthru
        _
      // Predicated region
      $region69: #{transformer_encoder_pallas.1} parent=59 // pred_check
        %p1883 = pneg %p279
      $region70: #{transformer_encoder_pallas.1} parent=59 // pred_check_branch
        %1885 = sbr.rel (%p1883) target = $region72
      $region71: #{transformer_encoder_pallas.1} parent=59 // pred_region
        _
      $region72: #{transformer_encoder_pallas.1} parent=59 // pred_fallthru
        _
    $region60: #{transformer_encoder_pallas.1} parent=5 // pred_fallthru
      _
    %p1886 = scmp.le.s32.totalorder 2, %s16
    // Predicated region
    $region73: #{transformer_encoder_pallas.1} parent=5 // pred_check
      %p1887 = pneg %p1886
    $region74: #{transformer_encoder_pallas.1} parent=5 // pred_check_branch
      %1889 = sbr.rel (%p1887) target = $region76
    $region75: #{transformer_encoder_pallas.1} parent=5 // pred_region
      %s1890 = ssub.s32 %s16, 2
    $region76: #{transformer_encoder_pallas.1} parent=5 // pred_fallthru
      _
  $region6: #{transformer_encoder_pallas.1} parent=0 // loop_footer
    %s20 = sadd.s32 1, %s16
  $region7: #{transformer_encoder_pallas.1} parent=0 // loop_footer_branch
    %15 = sbr.rel target = $region3
  $region8: #{transformer_encoder_pallas.1} parent=0 // loop_exit
    _

</llo_original>
